<compile_context>
chip_gen: v6e
topology: v6e:2x2x1
jax: 0.10.0
libtpu: 0.0.40
codegen_flags: <defaults>
</compile_context>

<pallas_src>
import functools

import jax
import jax.numpy as jnp
import numpy as np
from jax.experimental import pallas as pl
from jax.experimental.pallas import tpu as pltpu

_LANE = 128  # TPU lane width; channel dims are padded to multiples of this.


def _round_up(x, m):
    return (x + m - 1) // m * m


def _make_conv_stats_kernel(H, W, KH, KW):
    """3x3 conv as one im2col bf16 MXU matmul (fp32 accumulate) + bias.

    Also emits per-batch-element channel sum / sum-of-squares partials so the
    wrapper can form BatchNorm batch statistics without cross-grid accumulation
    (keeps the batch grid axis fully 'parallel').
    """

    def kernel(x_ref, w_ref, b_ref, y_ref, sum_ref, sq_ref):
        x = x_ref[...]                       # (1, Hp, Wp, Cinp) bf16
        cinp = x.shape[-1]
        coutp = y_ref.shape[-1]

        # im2col: one (H*W, KH*KW*Cinp) lane-dense patch slab (Cinp % 128 == 0),
        # so a single deep-K MXU matmul replaces KH*KW narrow-K matmuls.
        cols = []
        for kh in range(KH):                 # static unrolled taps
            for kw in range(KW):
                cols.append(x[0, kh:kh + H, kw:kw + W, :].reshape(H * W, cinp))
        patch = jnp.concatenate(cols, axis=1)          # (H*W, KH*KW*Cinp) bf16

        acc = jnp.dot(patch, w_ref[...],               # (H*W, Coutp) fp32
                      preferred_element_type=jnp.float32)
        acc = acc + b_ref[...]                         # bias broadcast (1, Coutp)

        y_ref[...] = acc.reshape(1, H * W, coutp).astype(y_ref.dtype)
        # Per-batch partial statistics (fp32, from the fp32 accumulator).
        sum_ref[...] = jnp.sum(acc, axis=0, keepdims=True).reshape(1, 1, coutp)
        sq_ref[...] = jnp.sum(acc * acc, axis=0, keepdims=True).reshape(1, 1, coutp)

    return kernel


def _bn_relu_kernel(y_ref, scale_ref, shift_ref, o_ref):
    """Fused affine BatchNorm (precomputed fp32 scale/shift) + ReLU, lane-dense."""
    y = y_ref[...].astype(jnp.float32)                 # (1, H*W, Coutp)
    o = jnp.maximum(y * scale_ref[...] + shift_ref[...], 0.0)
    o_ref[...] = o.astype(o_ref.dtype)


@functools.partial(jax.jit, static_argnames=("eps",))
def conv_block(x_nchw, w_oihw, bias, gamma, beta, eps=1e-5):
    """Forward pass of ConvBlock. Input/output in PyTorch NCHW layout (fp32)."""
    N, Cin, H, W = x_nchw.shape
    Cout, _, KH, KW = w_oihw.shape
    pad = (KH - 1) // 2
    Hp, Wp = H + 2 * pad, W + 2 * pad

    Cinp = _round_up(Cin, _LANE)
    Coutp = _round_up(Cout, _LANE)

    # NCHW -> NHWC, spatial halo pad, channel pad to lane multiple, bf16 cast.
    # (For tiny Cin this trades zero-FLOPs -- free on the underutilized MXU --
    # for lane-dense loads; for real UNETR channel counts the padding is small.)
    x = jnp.transpose(x_nchw, (0, 2, 3, 1)).astype(jnp.float32)
    x = jnp.pad(x, ((0, 0), (pad, pad), (pad, pad), (0, Cinp - Cin)))
    x = x.astype(jnp.bfloat16)

    # OIHW -> (KH*KW*Cinp, Coutp), zero-padded channels, bf16.
    w = jnp.transpose(w_oihw, (2, 3, 1, 0)).astype(jnp.float32)
    w = jnp.pad(w, ((0, 0), (0, 0), (0, Cinp - Cin), (0, Coutp - Cout)))
    w2 = w.reshape(KH * KW * Cinp, Coutp).astype(jnp.bfloat16)

    b2 = jnp.pad(bias.astype(jnp.float32), (0, Coutp - Cout)).reshape(1, Coutp)
    gamma_p = jnp.pad(gamma.astype(jnp.float32), (0, Coutp - Cout)).reshape(1, Coutp)
    beta_p = jnp.pad(beta.astype(jnp.float32), (0, Coutp - Cout)).reshape(1, Coutp)

    conv_kernel = _make_conv_stats_kernel(H, W, KH, KW)

    # TODO(synk): for large H/W/C (e.g. 224x224x256) add H-row tiles with a
    # 1-row halo (manual DMA) plus Cout tiles so per-step blocks fit v7x's
    # 64 MiB VMEM; at these shapes a whole (1, Hp, Wp, Cinp) block is tiny.
    conv_out, csum, csq = pl.pallas_call(
        conv_kernel,
        out_shape=(
            jax.ShapeDtypeStruct((N, H * W, Coutp), jnp.bfloat16),
            jax.ShapeDtypeStruct((N, 1, Coutp), jnp.float32),
            jax.ShapeDtypeStruct((N, 1, Coutp), jnp.float32),
        ),
        grid_spec=pltpu.PrefetchScalarGridSpec(
            num_scalar_prefetch=0,
            grid=(N,),
            in_specs=[
                pl.BlockSpec((1, Hp, Wp, Cinp), lambda n: (n, 0, 0, 0)),
                pl.BlockSpec((KH * KW * Cinp, Coutp), lambda n: (0, 0)),
                pl.BlockSpec((1, Coutp), lambda n: (0, 0)),
            ],
            out_specs=[
                pl.BlockSpec((1, H * W, Coutp), lambda n: (n, 0, 0)),
                pl.BlockSpec((1, 1, Coutp), lambda n: (n, 0, 0)),
                pl.BlockSpec((1, 1, Coutp), lambda n: (n, 0, 0)),
            ]),
        compiler_params=pltpu.CompilerParams(
            dimension_semantics=("parallel",)),   # per-batch partials -> parallel
    )(x, w2, b2)

    # BatchNorm2d (training mode): biased batch statistics over (N, H, W) per
    # channel, reduced from the per-batch fp32 partials.
    count = float(N * H * W)
    mean = jnp.sum(csum, axis=0) / count                   # (1, Coutp)
    var = jnp.sum(csq, axis=0) / count - mean * mean
    var = jnp.maximum(var, 0.0)        # guard E[x^2]-mean^2 cancellation
    scale = gamma_p / jnp.sqrt(var + eps)                   # (1, Coutp)
    shift = beta_p - mean * scale

    out = pl.pallas_call(
        _bn_relu_kernel,
        out_shape=jax.ShapeDtypeStruct((N, H * W, Coutp), jnp.bfloat16),
        grid_spec=pltpu.PrefetchScalarGridSpec(
            num_scalar_prefetch=0,
            grid=(N,),
            in_specs=[
                pl.BlockSpec((1, H * W, Coutp), lambda n: (n, 0, 0)),
                pl.BlockSpec((1, Coutp), lambda n: (0, 0)),
                pl.BlockSpec((1, Coutp), lambda n: (0, 0)),
            ],
            out_specs=pl.BlockSpec((1, H * W, Coutp), lambda n: (n, 0, 0))),
        input_output_aliases={0: 0},          # reuse the conv_out HBM buffer
        compiler_params=pltpu.CompilerParams(
            dimension_semantics=("parallel",)),
    )(conv_out, scale, shift)

    out = out.reshape(N, H, W, Coutp)[..., :Cout]           # drop channel pad
    return jnp.transpose(out, (0, 3, 1, 2)).astype(jnp.float32)   # back to NCHW


def _reference(x_nchw, w_oihw, bias, gamma, beta, eps=1e-5):
    y = jax.lax.conv_general_dilated(
        x_nchw, w_oihw, window_strides=(1, 1), padding=((1, 1), (1, 1)),
        dimension_numbers=("NCHW", "OIHW", "NCHW"))
    y = y + bias.reshape(1, -1, 1, 1)
    mean = jnp.mean(y, axis=(0, 2, 3), keepdims=True)
    var = jnp.var(y, axis=(0, 2, 3), keepdims=True)
    y = (y - mean) / jnp.sqrt(var + eps)
    y = y * gamma.reshape(1, -1, 1, 1) + beta.reshape(1, -1, 1, 1)
    return jnp.maximum(y, 0.0)


if __name__ == "__main__":
    N, Cin, H, W = 2, 4, 16, 16
    Cout, K = 8, 3

    key = jax.random.PRNGKey(0)
    kx, kw, kb = jax.random.split(key, 3)

    x = jax.random.normal(kx, (N, Cin, H, W), dtype=jnp.float32)

    # Deterministic parameter init (PyTorch-like: uniform(-1/sqrt(fan_in), ...)
    # for conv weight/bias; BN gamma=1, beta=0).
    fan_in = Cin * K * K
    bound = 1.0 / np.sqrt(fan_in)
    w = jax.random.uniform(kw, (Cout, Cin, K, K), jnp.float32, -bound, bound)
    b = jax.random.uniform(kb, (Cout,), jnp.float32, -bound, bound)
    gamma = jnp.ones((Cout,), jnp.float32)
    beta = jnp.zeros((Cout,), jnp.float32)

    out = conv_block(x, w, b, gamma, beta)
    out = jax.block_until_ready(out)

    ref = _reference(x, w, b, gamma, beta)
    # Tolerance sized for the bf16 MXU operands + bf16 intermediate (relative
    # error ~1e-2 on the O(1) batch-normalized outputs); stats are fp32.
    np.testing.assert_allclose(np.asarray(out), np.asarray(ref),
                               rtol=3e-2, atol=3e-2)

    print("KERNEL_OK")
</pallas_src>

<mosaic_0001>
module attributes {stable_mosaic.version = 11 : i64} {
  func.func @kernel(%arg0: i32, %arg1: memref<1x18x18x128xbf16, #tpu.memory_space<vmem>>, %arg2: memref<1152x128xbf16, #tpu.memory_space<vmem>>, %arg3: memref<1x128xf32, #tpu.memory_space<vmem>>, %arg4: memref<1x256x128xbf16, #tpu.memory_space<vmem>>, %arg5: memref<1x1x128xf32, #tpu.memory_space<vmem>>, %arg6: memref<1x1x128xf32, #tpu.memory_space<vmem>>) attributes {dimension_semantics = [#tpu.dimension_semantics<parallel>], iteration_bounds = array<i64: 2>, scalar_prefetch = 0 : i64, scratch_operands = 0 : i64, tpu.core_type = #tpu.core_type<tc>, window_params = [{transform_indices = @transform_0, window_bounds = array<i64: 1, 18, 18, 128>}, {pipeline_mode = #tpu.pipeline_mode<synchronous>, transform_indices = @transform_1, window_bounds = array<i64: 1152, 128>}, {pipeline_mode = #tpu.pipeline_mode<synchronous>, transform_indices = @transform_2, window_bounds = array<i64: 1, 128>}, {transform_indices = @transform_3, window_bounds = array<i64: 1, 256, 128>}, {transform_indices = @transform_4, window_bounds = array<i64: 1, 1, 128>}, {transform_indices = @transform_5, window_bounds = array<i64: 1, 1, 128>}]} {
    %c0 = arith.constant 0 : index
    %c0_0 = arith.constant 0 : index
    %c0_1 = arith.constant 0 : index
    %c0_2 = arith.constant 0 : index
    %0 = vector.load %arg1[%c0, %c0_0, %c0_1, %c0_2] : memref<1x18x18x128xbf16, #tpu.memory_space<vmem>>, vector<1x18x18x128xbf16>
    %1 = vector.extract_strided_slice %0 {offsets = [0, 0, 0, 0], sizes = [1, 16, 16, 128], strides = [1, 1, 1, 1]} : vector<1x18x18x128xbf16> to vector<1x16x16x128xbf16>
    %2 = vector.shape_cast %1 : vector<1x16x16x128xbf16> to vector<16x16x128xbf16>
    %3 = vector.shape_cast %2 : vector<16x16x128xbf16> to vector<256x128xbf16>
    %4 = vector.extract_strided_slice %0 {offsets = [0, 0, 1, 0], sizes = [1, 16, 16, 128], strides = [1, 1, 1, 1]} : vector<1x18x18x128xbf16> to vector<1x16x16x128xbf16>
    %5 = vector.shape_cast %4 : vector<1x16x16x128xbf16> to vector<16x16x128xbf16>
    %6 = vector.shape_cast %5 : vector<16x16x128xbf16> to vector<256x128xbf16>
    %7 = vector.extract_strided_slice %0 {offsets = [0, 0, 2, 0], sizes = [1, 16, 16, 128], strides = [1, 1, 1, 1]} : vector<1x18x18x128xbf16> to vector<1x16x16x128xbf16>
    %8 = vector.shape_cast %7 : vector<1x16x16x128xbf16> to vector<16x16x128xbf16>
    %9 = vector.shape_cast %8 : vector<16x16x128xbf16> to vector<256x128xbf16>
    %10 = vector.extract_strided_slice %0 {offsets = [0, 1, 0, 0], sizes = [1, 16, 16, 128], strides = [1, 1, 1, 1]} : vector<1x18x18x128xbf16> to vector<1x16x16x128xbf16>
    %11 = vector.shape_cast %10 : vector<1x16x16x128xbf16> to vector<16x16x128xbf16>
    %12 = vector.shape_cast %11 : vector<16x16x128xbf16> to vector<256x128xbf16>
    %13 = vector.extract_strided_slice %0 {offsets = [0, 1, 1, 0], sizes = [1, 16, 16, 128], strides = [1, 1, 1, 1]} : vector<1x18x18x128xbf16> to vector<1x16x16x128xbf16>
    %14 = vector.shape_cast %13 : vector<1x16x16x128xbf16> to vector<16x16x128xbf16>
    %15 = vector.shape_cast %14 : vector<16x16x128xbf16> to vector<256x128xbf16>
    %16 = vector.extract_strided_slice %0 {offsets = [0, 1, 2, 0], sizes = [1, 16, 16, 128], strides = [1, 1, 1, 1]} : vector<1x18x18x128xbf16> to vector<1x16x16x128xbf16>
    %17 = vector.shape_cast %16 : vector<1x16x16x128xbf16> to vector<16x16x128xbf16>
    %18 = vector.shape_cast %17 : vector<16x16x128xbf16> to vector<256x128xbf16>
    %19 = vector.extract_strided_slice %0 {offsets = [0, 2, 0, 0], sizes = [1, 16, 16, 128], strides = [1, 1, 1, 1]} : vector<1x18x18x128xbf16> to vector<1x16x16x128xbf16>
    %20 = vector.shape_cast %19 : vector<1x16x16x128xbf16> to vector<16x16x128xbf16>
    %21 = vector.shape_cast %20 : vector<16x16x128xbf16> to vector<256x128xbf16>
    %22 = vector.extract_strided_slice %0 {offsets = [0, 2, 1, 0], sizes = [1, 16, 16, 128], strides = [1, 1, 1, 1]} : vector<1x18x18x128xbf16> to vector<1x16x16x128xbf16>
    %23 = vector.shape_cast %22 : vector<1x16x16x128xbf16> to vector<16x16x128xbf16>
    %24 = vector.shape_cast %23 : vector<16x16x128xbf16> to vector<256x128xbf16>
    %25 = vector.extract_strided_slice %0 {offsets = [0, 2, 2, 0], sizes = [1, 16, 16, 128], strides = [1, 1, 1, 1]} : vector<1x18x18x128xbf16> to vector<1x16x16x128xbf16>
    %26 = vector.shape_cast %25 : vector<1x16x16x128xbf16> to vector<16x16x128xbf16>
    %27 = vector.shape_cast %26 : vector<16x16x128xbf16> to vector<256x128xbf16>
    %28 = tpu.concatenate %3, %6, %9, %12, %15, %18, %21, %24, %27 in 1 : vector<256x128xbf16>, vector<256x128xbf16>, vector<256x128xbf16>, vector<256x128xbf16>, vector<256x128xbf16>, vector<256x128xbf16>, vector<256x128xbf16>, vector<256x128xbf16>, vector<256x128xbf16> -> vector<256x1152xbf16>
    %c0_3 = arith.constant 0 : index
    %c0_4 = arith.constant 0 : index
    %29 = vector.load %arg2[%c0_3, %c0_4] : memref<1152x128xbf16, #tpu.memory_space<vmem>>, vector<1152x128xbf16>
    %cst = arith.constant dense<0.000000e+00> : vector<256x128xf32>
    %30 = tpu.matmul %28, %29, %cst {dimension_numbers = #tpu.dot_dimension_numbers<[1], [0], [0], [1], [0, 0, 1, 1], [], []>} : vector<256x1152xbf16>, vector<1152x128xbf16>, vector<256x128xf32> -> vector<256x128xf32>
    %c0_5 = arith.constant 0 : index
    %c0_6 = arith.constant 0 : index
    %31 = vector.load %arg3[%c0_5, %c0_6] : memref<1x128xf32, #tpu.memory_space<vmem>>, vector<1x128xf32>
    %32 = vector.broadcast %31 : vector<1x128xf32> to vector<256x128xf32>
    %33 = arith.addf %30, %32 : vector<256x128xf32>
    %34 = vector.shape_cast %33 : vector<256x128xf32> to vector<1x256x128xf32>
    %35 = arith.truncf %34 : vector<1x256x128xf32> to vector<1x256x128xbf16>
    %c0_7 = arith.constant 0 : index
    %c0_8 = arith.constant 0 : index
    %c0_9 = arith.constant 0 : index
    %36 = vector.load %arg4[%c0_7, %c0_8, %c0_9] : memref<1x256x128xbf16, #tpu.memory_space<vmem>>, vector<1x256x128xbf16>
    tpu.vector_store %arg4[%c0_7, %c0_8, %c0_9], %35 {strides = array<i32>} : memref<1x256x128xbf16, #tpu.memory_space<vmem>>, vector<1x256x128xbf16>,
    %cst_10 = arith.constant dense<0.000000e+00> : vector<128xf32>
    %37 = vector.multi_reduction <add>, %33, %cst_10 [0] : vector<256x128xf32> to vector<128xf32>
    %38 = vector.shape_cast %37 : vector<128xf32> to vector<1x128xf32>
    %39 = vector.shape_cast %38 : vector<1x128xf32> to vector<1x1x128xf32>
    %c0_11 = arith.constant 0 : index
    %c0_12 = arith.constant 0 : index
    %c0_13 = arith.constant 0 : index
    %40 = vector.load %arg5[%c0_11, %c0_12, %c0_13] : memref<1x1x128xf32, #tpu.memory_space<vmem>>, vector<1x1x128xf32>
    tpu.vector_store %arg5[%c0_11, %c0_12, %c0_13], %39 {strides = array<i32>} : memref<1x1x128xf32, #tpu.memory_space<vmem>>, vector<1x1x128xf32>,
    %41 = arith.mulf %33, %33 : vector<256x128xf32>
    %cst_14 = arith.constant dense<0.000000e+00> : vector<128xf32>
    %42 = vector.multi_reduction <add>, %41, %cst_14 [0] : vector<256x128xf32> to vector<128xf32>
    %43 = vector.shape_cast %42 : vector<128xf32> to vector<1x128xf32>
    %44 = vector.shape_cast %43 : vector<1x128xf32> to vector<1x1x128xf32>
    %c0_15 = arith.constant 0 : index
    %c0_16 = arith.constant 0 : index
    %c0_17 = arith.constant 0 : index
    %45 = vector.load %arg6[%c0_15, %c0_16, %c0_17] : memref<1x1x128xf32, #tpu.memory_space<vmem>>, vector<1x1x128xf32>
    tpu.vector_store %arg6[%c0_15, %c0_16, %c0_17], %44 {strides = array<i32>} : memref<1x1x128xf32, #tpu.memory_space<vmem>>, vector<1x1x128xf32>,
    return
  }
  func.func @transform_0(%arg0: i32) -> (i32, i32, i32, i32) {
    %c0_i32 = arith.constant 0 : i32
    %c0_i32_0 = arith.constant 0 : i32
    %c0_i32_1 = arith.constant 0 : i32
    %c0_i32_2 = arith.constant 0 : i32
    return %arg0, %c0_i32, %c0_i32_0, %c0_i32_1 : i32, i32, i32, i32
  }
  func.func @transform_1(%arg0: i32) -> (i32, i32) {
    %c0_i32 = arith.constant 0 : i32
    %c0_i32_0 = arith.constant 0 : i32
    %c0_i32_1 = arith.constant 0 : i32
    return %c0_i32, %c0_i32_0 : i32, i32
  }
  func.func @transform_2(%arg0: i32) -> (i32, i32) {
    %c0_i32 = arith.constant 0 : i32
    %c0_i32_0 = arith.constant 0 : i32
    %c0_i32_1 = arith.constant 0 : i32
    return %c0_i32, %c0_i32_0 : i32, i32
  }
  func.func @transform_3(%arg0: i32) -> (i32, i32, i32) {
    %c0_i32 = arith.constant 0 : i32
    %c0_i32_0 = arith.constant 0 : i32
    %c0_i32_1 = arith.constant 0 : i32
    return %arg0, %c0_i32, %c0_i32_0 : i32, i32, i32
  }
  func.func @transform_4(%arg0: i32) -> (i32, i32, i32) {
    %c0_i32 = arith.constant 0 : i32
    %c0_i32_0 = arith.constant 0 : i32
    %c0_i32_1 = arith.constant 0 : i32
    return %arg0, %c0_i32, %c0_i32_0 : i32, i32, i32
  }
  func.func @transform_5(%arg0: i32) -> (i32, i32, i32) {
    %c0_i32 = arith.constant 0 : i32
    %c0_i32_0 = arith.constant 0 : i32
    %c0_i32_1 = arith.constant 0 : i32
    return %arg0, %c0_i32, %c0_i32_0 : i32, i32, i32
  }
}

module attributes {stable_mosaic.version = 11 : i64} {
  func.func @_bn_relu_kernel(%arg0: i32, %arg1: memref<1x256x128xbf16, #tpu.memory_space<vmem>>, %arg2: memref<1x128xf32, #tpu.memory_space<vmem>>, %arg3: memref<1x128xf32, #tpu.memory_space<vmem>>, %arg4: memref<1x256x128xbf16, #tpu.memory_space<vmem>>) attributes {dimension_semantics = [#tpu.dimension_semantics<parallel>], iteration_bounds = array<i64: 2>, scalar_prefetch = 0 : i64, scratch_operands = 0 : i64, tpu.core_type = #tpu.core_type<tc>, window_params = [{transform_indices = @transform_0, window_bounds = array<i64: 1, 256, 128>}, {pipeline_mode = #tpu.pipeline_mode<synchronous>, transform_indices = @transform_1, window_bounds = array<i64: 1, 128>}, {pipeline_mode = #tpu.pipeline_mode<synchronous>, transform_indices = @transform_2, window_bounds = array<i64: 1, 128>}, {transform_indices = @transform_3, window_bounds = array<i64: 1, 256, 128>}]} {
    %c0 = arith.constant 0 : index
    %c0_0 = arith.constant 0 : index
    %c0_1 = arith.constant 0 : index
    %0 = vector.load %arg1[%c0, %c0_0, %c0_1] : memref<1x256x128xbf16, #tpu.memory_space<vmem>>, vector<1x256x128xbf16>
    %1 = arith.extf %0 : vector<1x256x128xbf16> to vector<1x256x128xf32>
    %c0_2 = arith.constant 0 : index
    %c0_3 = arith.constant 0 : index
    %2 = vector.load %arg2[%c0_2, %c0_3] : memref<1x128xf32, #tpu.memory_space<vmem>>, vector<1x128xf32>
    %3 = vector.shape_cast %2 : vector<1x128xf32> to vector<1x1x128xf32>
    %4 = vector.broadcast %3 : vector<1x1x128xf32> to vector<1x256x128xf32>
    %5 = arith.mulf %1, %4 : vector<1x256x128xf32>
    %c0_4 = arith.constant 0 : index
    %c0_5 = arith.constant 0 : index
    %6 = vector.load %arg3[%c0_4, %c0_5] : memref<1x128xf32, #tpu.memory_space<vmem>>, vector<1x128xf32>
    %7 = vector.shape_cast %6 : vector<1x128xf32> to vector<1x1x128xf32>
    %8 = vector.broadcast %7 : vector<1x1x128xf32> to vector<1x256x128xf32>
    %9 = arith.addf %5, %8 : vector<1x256x128xf32>
    %cst = arith.constant 0.000000e+00 : f32
    %10 = vector.broadcast %cst : f32 to vector<1x256x128xf32>
    %11 = arith.maximumf %9, %10 : vector<1x256x128xf32>
    %12 = arith.truncf %11 : vector<1x256x128xf32> to vector<1x256x128xbf16>
    %c0_6 = arith.constant 0 : index
    %c0_7 = arith.constant 0 : index
    %c0_8 = arith.constant 0 : index
    %13 = vector.load %arg4[%c0_6, %c0_7, %c0_8] : memref<1x256x128xbf16, #tpu.memory_space<vmem>>, vector<1x256x128xbf16>
    tpu.vector_store %arg4[%c0_6, %c0_7, %c0_8], %12 {strides = array<i32>} : memref<1x256x128xbf16, #tpu.memory_space<vmem>>, vector<1x256x128xbf16>,
    return
  }
  func.func @transform_0(%arg0: i32) -> (i32, i32, i32) {
    %c0_i32 = arith.constant 0 : i32
    %c0_i32_0 = arith.constant 0 : i32
    %c0_i32_1 = arith.constant 0 : i32
    return %arg0, %c0_i32, %c0_i32_0 : i32, i32, i32
  }
  func.func @transform_1(%arg0: i32) -> (i32, i32) {
    %c0_i32 = arith.constant 0 : i32
    %c0_i32_0 = arith.constant 0 : i32
    %c0_i32_1 = arith.constant 0 : i32
    return %c0_i32, %c0_i32_0 : i32, i32
  }
  func.func @transform_2(%arg0: i32) -> (i32, i32) {
    %c0_i32 = arith.constant 0 : i32
    %c0_i32_0 = arith.constant 0 : i32
    %c0_i32_1 = arith.constant 0 : i32
    return %c0_i32, %c0_i32_0 : i32, i32
  }
  func.func @transform_3(%arg0: i32) -> (i32, i32, i32) {
    %c0_i32 = arith.constant 0 : i32
    %c0_i32_0 = arith.constant 0 : i32
    %c0_i32_1 = arith.constant 0 : i32
    return %arg0, %c0_i32, %c0_i32_0 : i32, i32, i32
  }
}

</mosaic_0001>

<llo_original>
// kernel: conv_block.3
$region0: #{conv_block.3}
  #allocation0 [shape = 'u32[]', space=smem, size = 0x4, offset = 0x4, fixed_abs, tag = 'smem constant byte address 0x4 - core index']
  #allocation1 [shape = 'u32[144,128]{1,0:T(1,128)}', space=vmem, size = 0x12000, scoped, tag = 'internal scratch']
  %s0 = inlined_call_operand.vmem [shape: bf16[2,256,128], index: 0, kind: input, shape index: {}, may-alias: {0,3}]
  %s1 = inlined_call_operand.vmem [shape: f32[1,128], index: 1, kind: input, shape index: {}]
  %s2 = inlined_call_operand.vmem [shape: f32[1,128], index: 2, kind: input, shape index: {}]
  %s3 = inlined_call_operand.vmem [shape: bf16[2,256,128], index: 3, kind: output, shape index: {}, may-alias: {0,3}]
  %s4 = sld [smem:[#allocation0]]
  $region45: #{conv_block.3} parent=0
    _
  %s6 = ssub.s32 1, %s4
  %s7 = scalar_select 0, %s6, %s4
  loop: start=0, step=1, limit=4
  $region2: #{conv_block.3} parent=0 // loop_pre_header
    _
  $region3: #{conv_block.3} parent=0 // loop_header
    %s9 = sphi 0, %s13
    %p10 = scmp.ge.s32.totalorder %s9, 4
    %s19 = sphi 0, %s21
    %s22 = sphi 0, %s19
    %s23 = sphi 0, %s22
    %s39 = sphi 0, %s23
    %s43 = sphi 0, %s43
    %s45 = sphi 0, %s43
    %s46 = sphi 0, %s45
    %s60 = sphi 0, %s46
    %s64 = sphi 0, %s64
    %s66 = sphi 0, %s64
    %s67 = sphi 0, %s66
    %s81 = sphi 0, %s67
    %s87 = sphi 0, %s89
    %s90 = sphi 0, %s87
    %s91 = sphi 0, %s90
    %s107 = sphi 0, %s91
  $region4: #{conv_block.3} parent=0 // loop_header_branch
    %12 = sbr.rel (%p10) target = $region8
  $region5: #{conv_block.3} parent=0 // loop_body
    %s14 = ssub.s32 %s9, 1
    %s15 = ssub.s32 %s9, 2
    %s16 = sadd.s32 %s9, 1
    %s17 = ssub.s32 %s9, %s16
    %p18 = scmp.eq.s32.totalorder %s17, 0
    %s20 = sadd.s32 %s19, 1
    %s21 = scalar_select %p18, %s19, %s20
    %p24 = pneg %p18
    %p25 = scmp.eq.s32.totalorder %s9, 1
    %p26 = por %p24, %p25
    %p27 = scmp.ne.s32.totalorder %s19, %s22
    %p28 = scmp.eq.s32.totalorder %s9, 0
    %p29 = por %p27, %p28
    %p30 = scmp.ne.s32.totalorder %s19, %s22
    %p31 = scmp.eq.s32.totalorder %s14, 1
    %p32 = por %p30, %p31
    %p33 = scmp.ne.s32.totalorder %s22, %s23
    %p34 = scmp.eq.s32.totalorder %s14, 0
    %p35 = por %p33, %p34
    %p36 = scmp.ne.s32.totalorder %s22, %s23
    %p37 = scmp.eq.s32.totalorder %s15, 1
    %p38 = por %p36, %p37
    %p40 = scmp.ne.s32.totalorder %s23, %s39
    %p41 = scmp.eq.s32.totalorder %s15, 0
    %p42 = por %p40, %p41
    %s44 = sadd.s32 %s43, 1
    %p47 = scmp.eq.s32.totalorder %s9, 1
    %p48 = scmp.ne.s32.totalorder %s43, %s45
    %p49 = scmp.eq.s32.totalorder %s9, 0
    %p50 = por %p48, %p49
    %p51 = scmp.ne.s32.totalorder %s43, %s45
    %p52 = scmp.eq.s32.totalorder %s14, 1
    %p53 = por %p51, %p52
    %p54 = scmp.ne.s32.totalorder %s45, %s46
    %p55 = scmp.eq.s32.totalorder %s14, 0
    %p56 = por %p54, %p55
    %p57 = scmp.ne.s32.totalorder %s45, %s46
    %p58 = scmp.eq.s32.totalorder %s15, 1
    %p59 = por %p57, %p58
    %p61 = scmp.ne.s32.totalorder %s46, %s60
    %p62 = scmp.eq.s32.totalorder %s15, 0
    %p63 = por %p61, %p62
    %s65 = sadd.s32 %s64, 1
    %p68 = scmp.eq.s32.totalorder %s9, 1
    %p69 = scmp.ne.s32.totalorder %s64, %s66
    %p70 = scmp.eq.s32.totalorder %s9, 0
    %p71 = por %p69, %p70
    %p72 = scmp.ne.s32.totalorder %s64, %s66
    %p73 = scmp.eq.s32.totalorder %s14, 1
    %p74 = por %p72, %p73
    %p75 = scmp.ne.s32.totalorder %s66, %s67
    %p76 = scmp.eq.s32.totalorder %s14, 0
    %p77 = por %p75, %p76
    %p78 = scmp.ne.s32.totalorder %s66, %s67
    %p79 = scmp.eq.s32.totalorder %s15, 1
    %p80 = por %p78, %p79
    %p82 = scmp.ne.s32.totalorder %s67, %s81
    %p83 = scmp.eq.s32.totalorder %s15, 0
    %p84 = por %p82, %p83
    %s85 = ssub.s32 %s9, %s16
    %p86 = scmp.eq.s32.totalorder %s85, 0
    %s88 = sadd.s32 %s87, 1
    %s89 = scalar_select %p86, %s87, %s88
    %p92 = pneg %p86
    %p93 = scmp.eq.s32.totalorder %s9, 1
    %p94 = por %p92, %p93
    %p95 = scmp.ne.s32.totalorder %s87, %s90
    %p96 = scmp.eq.s32.totalorder %s9, 0
    %p97 = por %p95, %p96
    %p98 = scmp.ne.s32.totalorder %s87, %s90
    %p99 = scmp.eq.s32.totalorder %s14, 1
    %p100 = por %p98, %p99
    %p101 = scmp.ne.s32.totalorder %s90, %s91
    %p102 = scmp.eq.s32.totalorder %s14, 0
    %p103 = por %p101, %p102
    %p104 = scmp.ne.s32.totalorder %s90, %s91
    %p105 = scmp.eq.s32.totalorder %s15, 1
    %p106 = por %p104, %p105
    %p108 = scmp.ne.s32.totalorder %s91, %s107
    %p109 = scmp.eq.s32.totalorder %s15, 0
    %p110 = por %p108, %p109
    %p111 = scmp.le.s32.totalorder 1, %s9
    %p112 = scmp.lt.s32.totalorder %s9, 3
    %p113 = pnand %p111, %p112
    %p114 = pneg %p113
    // Predicated region
    $region9: #{conv_block.3} parent=5 // pred_check
      _
    $region10: #{conv_block.3} parent=5 // pred_check_branch
      %116 = sbr.rel (%p113) target = $region12
    $region11: #{conv_block.3} parent=5 // pred_region
      %s117 = ssub.s32 %s9, 1
      // Predicated region
      $region13: #{conv_block.3} parent=11 // pred_check
        %p118 = pneg %p56
      $region14: #{conv_block.3} parent=11 // pred_check_branch
        %120 = sbr.rel (%p118) target = $region16
      $region15: #{conv_block.3} parent=11 // pred_region
        _
      $region16: #{conv_block.3} parent=11 // pred_fallthru
        _
      // Predicated region
      $region17: #{conv_block.3} parent=11 // pred_check
        %p121 = pneg %p77
      $region18: #{conv_block.3} parent=11 // pred_check_branch
        %123 = sbr.rel (%p121) target = $region20
      $region19: #{conv_block.3} parent=11 // pred_region
        _
      $region20: #{conv_block.3} parent=11 // pred_fallthru
        _
    $region12: #{conv_block.3} parent=5 // pred_fallthru
      _
    %p124 = scmp.lt.s32.totalorder %s9, 2
    // Predicated region
    $region21: #{conv_block.3} parent=5 // pred_check
      %p125 = pneg %p124
    $region22: #{conv_block.3} parent=5 // pred_check_branch
      %127 = sbr.rel (%p125) target = $region24
    $region23: #{conv_block.3} parent=5 // pred_region
      // Predicated region
      $region25: #{conv_block.3} parent=23 // pred_check
        %p128 = pneg %p29
      $region26: #{conv_block.3} parent=23 // pred_check_branch
        %130 = sbr.rel (%p128) target = $region28
      $region27: #{conv_block.3} parent=23 // pred_region
        %p131 = scmp.lt.s32.totalorder %s9, 1
        %s132 = scalar_select %p131, %s9, 1
        %s133 = smul.addr %s132, 32
        %s134 = smul.addr %s133, 4
        %s135 = scalar_lea.vmem %s0, %s134
      $region28: #{conv_block.3} parent=23 // pred_fallthru
        _
    $region24: #{conv_block.3} parent=5 // pred_fallthru
      _
    %p136 = scmp.le.s32.totalorder 1, %s9
    %p137 = scmp.lt.s32.totalorder %s9, 3
    %p138 = pnand %p136, %p137
    %p139 = pneg %p138
    // Predicated region
    $region29: #{conv_block.3} parent=5 // pred_check
      _
    $region30: #{conv_block.3} parent=5 // pred_check_branch
      %141 = sbr.rel (%p138) target = $region32
    $region31: #{conv_block.3} parent=5 // pred_region
      %s142 = ssub.s32 %s9, 1
      %p143 = scmp.lt.s32.totalorder %s14, 1
      %s144 = scalar_select %p143, %s14, 1
      %s145 = smul.addr %s144, 32
      %s146 = smul.addr %s145, 4
      %s147 = scalar_lea.vmem %s0, %s146
      %p148 = pneg %p35
      %p149 = pneg %p32
      %p150 = pneg %p56
      %p151 = pneg %p53
      %p152 = pneg %p77
      %p153 = pneg %p74
      %p154 = pneg %p103
      %p155 = pneg %p100
      %p156 = scmp.lt.s32.totalorder %s14, 1
      %s157 = scalar_select %p156, %s14, 1
      %s158 = smul.addr %s157, 32
      %s159 = smul.addr %s158, 4
      %s160 = scalar_lea.vmem %s3, %s159
      %p161 = scmp.lt.s32.totalorder %s14, 1
      %s162 = scalar_select %p161, %s14, 1
      %s163 = smul.addr %s162, 32
      %s164 = smul.addr %s163, 4
      %s165 = scalar_lea.vmem %s0, %s164
      %p166 = scmp.lt.s32.totalorder %s14, 1
      %s167 = scalar_select %p166, %s14, 1
      %s168 = smul.addr %s167, 32
      %s169 = smul.addr %s168, 4
      %s170 = scalar_lea.vmem %s3, %s169
      %v171 = vld [vmem:[%s165] sm:$0xf]
      %v172 = vld [vmem:[%s165 + $0x4] sm:$0xf]
      %v173 = vld [vmem:[%s165 + $0x8] sm:$0xf]
      %v174 = vld [vmem:[%s165 + $0xc] sm:$0xf]
      %v175 = vld [vmem:[%s165 + $0x10] sm:$0xf]
      %v176 = vld [vmem:[%s165 + $0x14] sm:$0xf]
      %v177 = vld [vmem:[%s165 + $0x18] sm:$0xf]
      %v178 = vld [vmem:[%s165 + $0x1c] sm:$0xf]
      %v179 = vld [vmem:[%s165 + $0x20] sm:$0xf]
      %v180 = vld [vmem:[%s165 + $0x24] sm:$0xf]
      %v181 = vld [vmem:[%s165 + $0x28] sm:$0xf]
      %v182 = vld [vmem:[%s165 + $0x2c] sm:$0xf]
      %v183 = vld [vmem:[%s165 + $0x30] sm:$0xf]
      %v184 = vld [vmem:[%s165 + $0x34] sm:$0xf]
      %v185 = vld [vmem:[%s165 + $0x38] sm:$0xf]
      %v186 = vld [vmem:[%s165 + $0x3c] sm:$0xf]
      %v187 = vld [vmem:[%s165 + $0x40] sm:$0xf]
      %v188 = vld [vmem:[%s165 + $0x44] sm:$0xf]
      %v189 = vld [vmem:[%s165 + $0x48] sm:$0xf]
      %v190 = vld [vmem:[%s165 + $0x4c] sm:$0xf]
      %v191 = vld [vmem:[%s165 + $0x50] sm:$0xf]
      %v192 = vld [vmem:[%s165 + $0x54] sm:$0xf]
      %v193 = vld [vmem:[%s165 + $0x58] sm:$0xf]
      %v194 = vld [vmem:[%s165 + $0x5c] sm:$0xf]
      %v195 = vld [vmem:[%s165 + $0x60] sm:$0xf]
      %v196 = vld [vmem:[%s165 + $0x64] sm:$0xf]
      %v197 = vld [vmem:[%s165 + $0x68] sm:$0xf]
      %v198 = vld [vmem:[%s165 + $0x6c] sm:$0xf]
      %v199 = vld [vmem:[%s165 + $0x70] sm:$0xf]
      %v200 = vld [vmem:[%s165 + $0x74] sm:$0xf]
      %v201 = vld [vmem:[%s165 + $0x78] sm:$0xf]
      %v202 = vld [vmem:[%s165 + $0x7c] sm:$0xf]
      %v203 = vunpack.c.l.bf16 %v171
      %v204 = vunpack.c.l.bf16 %v172
      %v205 = vunpack.c.l.bf16 %v173
      %v206 = vunpack.c.l.bf16 %v174
      %v207 = vunpack.c.l.bf16 %v175
      %v208 = vunpack.c.l.bf16 %v176
      %v209 = vunpack.c.l.bf16 %v177
      %v210 = vunpack.c.l.bf16 %v178
      %v211 = vunpack.c.l.bf16 %v179
      %v212 = vunpack.c.l.bf16 %v180
      %v213 = vunpack.c.l.bf16 %v181
      %v214 = vunpack.c.l.bf16 %v182
      %v215 = vunpack.c.l.bf16 %v183
      %v216 = vunpack.c.l.bf16 %v184
      %v217 = vunpack.c.l.bf16 %v185
      %v218 = vunpack.c.l.bf16 %v186
      %v219 = vunpack.c.l.bf16 %v187
      %v220 = vunpack.c.l.bf16 %v188
      %v221 = vunpack.c.l.bf16 %v189
      %v222 = vunpack.c.l.bf16 %v190
      %v223 = vunpack.c.l.bf16 %v191
      %v224 = vunpack.c.l.bf16 %v192
      %v225 = vunpack.c.l.bf16 %v193
      %v226 = vunpack.c.l.bf16 %v194
      %v227 = vunpack.c.l.bf16 %v195
      %v228 = vunpack.c.l.bf16 %v196
      %v229 = vunpack.c.l.bf16 %v197
      %v230 = vunpack.c.l.bf16 %v198
      %v231 = vunpack.c.l.bf16 %v199
      %v232 = vunpack.c.l.bf16 %v200
      %v233 = vunpack.c.l.bf16 %v201
      %v234 = vunpack.c.l.bf16 %v202
      %v235 = vld [vmem:[%s1] sm:$0x1]
      %v237 = vlaneseq
      %v238 = vshrl.u32 %v237, 7
      %v239 = vsub.s32 0, %v238
      %v240 = vrot.slane %v235, %v239
      %v242 = vmul.f32 %v203, %v240
      %v243 = vmul.f32 %v204, %v240
      %v244 = vmul.f32 %v205, %v240
      %v245 = vmul.f32 %v206, %v240
      %v246 = vmul.f32 %v207, %v240
      %v247 = vmul.f32 %v208, %v240
      %v248 = vmul.f32 %v209, %v240
      %v249 = vmul.f32 %v210, %v240
      %v250 = vmul.f32 %v211, %v240
      %v251 = vmul.f32 %v212, %v240
      %v252 = vmul.f32 %v213, %v240
      %v253 = vmul.f32 %v214, %v240
      %v254 = vmul.f32 %v215, %v240
      %v255 = vmul.f32 %v216, %v240
      %v256 = vmul.f32 %v217, %v240
      %v257 = vmul.f32 %v218, %v240
      %v258 = vmul.f32 %v219, %v240
      %v259 = vmul.f32 %v220, %v240
      %v260 = vmul.f32 %v221, %v240
      %v261 = vmul.f32 %v222, %v240
      %v262 = vmul.f32 %v223, %v240
      %v263 = vmul.f32 %v224, %v240
      %v264 = vmul.f32 %v225, %v240
      %v265 = vmul.f32 %v226, %v240
      %v266 = vmul.f32 %v227, %v240
      %v267 = vmul.f32 %v228, %v240
      %v268 = vmul.f32 %v229, %v240
      %v269 = vmul.f32 %v230, %v240
      %v270 = vmul.f32 %v231, %v240
      %v271 = vmul.f32 %v232, %v240
      %v272 = vmul.f32 %v233, %v240
      %v273 = vmul.f32 %v234, %v240
      %v274 = vld [vmem:[%s2] sm:$0x1]
      %v276 = vlaneseq
      %v277 = vshrl.u32 %v276, 7
      %v278 = vsub.s32 0, %v277
      %v279 = vrot.slane %v274, %v278
      %v281 = vadd.f32 %v242, %v279
      %v282 = vadd.f32 %v243, %v279
      %v283 = vadd.f32 %v244, %v279
      %v284 = vadd.f32 %v245, %v279
      %v285 = vadd.f32 %v246, %v279
      %v286 = vadd.f32 %v247, %v279
      %v287 = vadd.f32 %v248, %v279
      %v288 = vadd.f32 %v249, %v279
      %v289 = vadd.f32 %v250, %v279
      %v290 = vadd.f32 %v251, %v279
      %v291 = vadd.f32 %v252, %v279
      %v292 = vadd.f32 %v253, %v279
      %v293 = vadd.f32 %v254, %v279
      %v294 = vadd.f32 %v255, %v279
      %v295 = vadd.f32 %v256, %v279
      %v296 = vadd.f32 %v257, %v279
      %v297 = vadd.f32 %v258, %v279
      %v298 = vadd.f32 %v259, %v279
      %v299 = vadd.f32 %v260, %v279
      %v300 = vadd.f32 %v261, %v279
      %v301 = vadd.f32 %v262, %v279
      %v302 = vadd.f32 %v263, %v279
      %v303 = vadd.f32 %v264, %v279
      %v304 = vadd.f32 %v265, %v279
      %v305 = vadd.f32 %v266, %v279
      %v306 = vadd.f32 %v267, %v279
      %v307 = vadd.f32 %v268, %v279
      %v308 = vadd.f32 %v269, %v279
      %v309 = vadd.f32 %v270, %v279
      %v310 = vadd.f32 %v271, %v279
      %v311 = vadd.f32 %v272, %v279
      %v312 = vadd.f32 %v273, %v279
      %v313 = vmax.f32 %v281, 0.0
      %v314 = vmax.f32 %v282, 0.0
      %v315 = vmax.f32 %v283, 0.0
      %v316 = vmax.f32 %v284, 0.0
      %v317 = vmax.f32 %v285, 0.0
      %v318 = vmax.f32 %v286, 0.0
      %v319 = vmax.f32 %v287, 0.0
      %v320 = vmax.f32 %v288, 0.0
      %v321 = vmax.f32 %v289, 0.0
      %v322 = vmax.f32 %v290, 0.0
      %v323 = vmax.f32 %v291, 0.0
      %v324 = vmax.f32 %v292, 0.0
      %v325 = vmax.f32 %v293, 0.0
      %v326 = vmax.f32 %v294, 0.0
      %v327 = vmax.f32 %v295, 0.0
      %v328 = vmax.f32 %v296, 0.0
      %v329 = vmax.f32 %v297, 0.0
      %v330 = vmax.f32 %v298, 0.0
      %v331 = vmax.f32 %v299, 0.0
      %v332 = vmax.f32 %v300, 0.0
      %v333 = vmax.f32 %v301, 0.0
      %v334 = vmax.f32 %v302, 0.0
      %v335 = vmax.f32 %v303, 0.0
      %v336 = vmax.f32 %v304, 0.0
      %v337 = vmax.f32 %v305, 0.0
      %v338 = vmax.f32 %v306, 0.0
      %v339 = vmax.f32 %v307, 0.0
      %v340 = vmax.f32 %v308, 0.0
      %v341 = vmax.f32 %v309, 0.0
      %v342 = vmax.f32 %v310, 0.0
      %v343 = vmax.f32 %v311, 0.0
      %v344 = vmax.f32 %v312, 0.0
      %v345 = vpack.c.bf16 %v314, %v313
      %v346 = vpack.c.bf16 %v316, %v315
      %v347 = vpack.c.bf16 %v318, %v317
      %v348 = vpack.c.bf16 %v320, %v319
      %v349 = vpack.c.bf16 %v322, %v321
      %v350 = vpack.c.bf16 %v324, %v323
      %v351 = vpack.c.bf16 %v326, %v325
      %v352 = vpack.c.bf16 %v328, %v327
      %v353 = vpack.c.bf16 %v330, %v329
      %v354 = vpack.c.bf16 %v332, %v331
      %v355 = vpack.c.bf16 %v334, %v333
      %v356 = vpack.c.bf16 %v336, %v335
      %v357 = vpack.c.bf16 %v338, %v337
      %v358 = vpack.c.bf16 %v340, %v339
      %v359 = vpack.c.bf16 %v342, %v341
      %v360 = vpack.c.bf16 %v344, %v343
      %v377 = vunpack.c.l.b16 %v345
      %v378 = vunpack.c.h.b16 %v345
      %v379 = vunpack.c.l.b16 %v346
      %v380 = vunpack.c.h.b16 %v346
      %v381 = vunpack.c.l.b16 %v347
      %v382 = vunpack.c.h.b16 %v347
      %v383 = vunpack.c.l.b16 %v348
      %v384 = vunpack.c.h.b16 %v348
      %v385 = vunpack.c.l.b16 %v349
      %v386 = vunpack.c.h.b16 %v349
      %v387 = vunpack.c.l.b16 %v350
      %v388 = vunpack.c.h.b16 %v350
      %v389 = vunpack.c.l.b16 %v351
      %v390 = vunpack.c.h.b16 %v351
      %v391 = vunpack.c.l.b16 %v352
      %v392 = vunpack.c.h.b16 %v352
      %v393 = vunpack.c.l.b16 %v353
      %v394 = vunpack.c.h.b16 %v353
      %v395 = vunpack.c.l.b16 %v354
      %v396 = vunpack.c.h.b16 %v354
      %v397 = vunpack.c.l.b16 %v355
      %v398 = vunpack.c.h.b16 %v355
      %v399 = vunpack.c.l.b16 %v356
      %v400 = vunpack.c.h.b16 %v356
      %v401 = vunpack.c.l.b16 %v357
      %v402 = vunpack.c.h.b16 %v357
      %v403 = vunpack.c.l.b16 %v358
      %v404 = vunpack.c.h.b16 %v358
      %v405 = vunpack.c.l.b16 %v359
      %v406 = vunpack.c.h.b16 %v359
      %v407 = vunpack.c.l.b16 %v360
      %v408 = vunpack.c.h.b16 %v360
      %v409 = vpack.c.b16 %v377, %v377
      %v410 = vpack.c.b16 %v378, %v378
      %v411 = vpack.c.b16 %v379, %v379
      %v412 = vpack.c.b16 %v380, %v380
      %v413 = vpack.c.b16 %v381, %v381
      %v414 = vpack.c.b16 %v382, %v382
      %v415 = vpack.c.b16 %v383, %v383
      %v416 = vpack.c.b16 %v384, %v384
      %v417 = vpack.c.b16 %v385, %v385
      %v418 = vpack.c.b16 %v386, %v386
      %v419 = vpack.c.b16 %v387, %v387
      %v420 = vpack.c.b16 %v388, %v388
      %v421 = vpack.c.b16 %v389, %v389
      %v422 = vpack.c.b16 %v390, %v390
      %v423 = vpack.c.b16 %v391, %v391
      %v424 = vpack.c.b16 %v392, %v392
      %v425 = vpack.c.b16 %v393, %v393
      %v426 = vpack.c.b16 %v394, %v394
      %v427 = vpack.c.b16 %v395, %v395
      %v428 = vpack.c.b16 %v396, %v396
      %v429 = vpack.c.b16 %v397, %v397
      %v430 = vpack.c.b16 %v398, %v398
      %v431 = vpack.c.b16 %v399, %v399
      %v432 = vpack.c.b16 %v400, %v400
      %v433 = vpack.c.b16 %v401, %v401
      %v434 = vpack.c.b16 %v402, %v402
      %v435 = vpack.c.b16 %v403, %v403
      %v436 = vpack.c.b16 %v404, %v404
      %v437 = vpack.c.b16 %v405, %v405
      %v438 = vpack.c.b16 %v406, %v406
      %v439 = vpack.c.b16 %v407, %v407
      %v440 = vpack.c.b16 %v408, %v408
      %473 = vst [vmem:[%s170] sm:$0xf] %v409
      %474 = vst [vmem:[%s170 + $0x4] sm:$0xf] %v410
      %475 = vst [vmem:[%s170 + $0x8] sm:$0xf] %v411
      %476 = vst [vmem:[%s170 + $0xc] sm:$0xf] %v412
      %477 = vst [vmem:[%s170 + $0x10] sm:$0xf] %v413
      %478 = vst [vmem:[%s170 + $0x14] sm:$0xf] %v414
      %479 = vst [vmem:[%s170 + $0x18] sm:$0xf] %v415
      %480 = vst [vmem:[%s170 + $0x1c] sm:$0xf] %v416
      %481 = vst [vmem:[%s170 + $0x20] sm:$0xf] %v417
      %482 = vst [vmem:[%s170 + $0x24] sm:$0xf] %v418
      %483 = vst [vmem:[%s170 + $0x28] sm:$0xf] %v419
      %484 = vst [vmem:[%s170 + $0x2c] sm:$0xf] %v420
      %485 = vst [vmem:[%s170 + $0x30] sm:$0xf] %v421
      %486 = vst [vmem:[%s170 + $0x34] sm:$0xf] %v422
      %487 = vst [vmem:[%s170 + $0x38] sm:$0xf] %v423
      %488 = vst [vmem:[%s170 + $0x3c] sm:$0xf] %v424
      %489 = vst [vmem:[%s170 + $0x40] sm:$0xf] %v425
      %490 = vst [vmem:[%s170 + $0x44] sm:$0xf] %v426
      %491 = vst [vmem:[%s170 + $0x48] sm:$0xf] %v427
      %492 = vst [vmem:[%s170 + $0x4c] sm:$0xf] %v428
      %493 = vst [vmem:[%s170 + $0x50] sm:$0xf] %v429
      %494 = vst [vmem:[%s170 + $0x54] sm:$0xf] %v430
      %495 = vst [vmem:[%s170 + $0x58] sm:$0xf] %v431
      %496 = vst [vmem:[%s170 + $0x5c] sm:$0xf] %v432
      %497 = vst [vmem:[%s170 + $0x60] sm:$0xf] %v433
      %498 = vst [vmem:[%s170 + $0x64] sm:$0xf] %v434
      %499 = vst [vmem:[%s170 + $0x68] sm:$0xf] %v435
      %500 = vst [vmem:[%s170 + $0x6c] sm:$0xf] %v436
      %501 = vst [vmem:[%s170 + $0x70] sm:$0xf] %v437
      %502 = vst [vmem:[%s170 + $0x74] sm:$0xf] %v438
      %503 = vst [vmem:[%s170 + $0x78] sm:$0xf] %v439
      %504 = vst [vmem:[%s170 + $0x7c] sm:$0xf] %v440
      %p505 = scmp.lt.s32.totalorder %s14, 1
      %s506 = scalar_select %p505, %s14, 1
      %s507 = smul.addr %s506, 32
      %s508 = smul.addr %s507, 4
      %s509 = scalar_lea.vmem %s3, %s508
      // Predicated region
      $region33: #{conv_block.3} parent=31 // pred_check
        %p510 = pneg %p100
      $region34: #{conv_block.3} parent=31 // pred_check_branch
        %512 = sbr.rel (%p510) target = $region36
      $region35: #{conv_block.3} parent=31 // pred_region
        _
      $region36: #{conv_block.3} parent=31 // pred_fallthru
        _
    $region32: #{conv_block.3} parent=5 // pred_fallthru
      _
    %p513 = scmp.le.s32.totalorder 2, %s9
    // Predicated region
    $region37: #{conv_block.3} parent=5 // pred_check
      %p514 = pneg %p513
    $region38: #{conv_block.3} parent=5 // pred_check_branch
      %516 = sbr.rel (%p514) target = $region40
    $region39: #{conv_block.3} parent=5 // pred_region
      %s517 = ssub.s32 %s9, 2
      // Predicated region
      $region41: #{conv_block.3} parent=39 // pred_check
        %p518 = pneg %p106
      $region42: #{conv_block.3} parent=39 // pred_check_branch
        %520 = sbr.rel (%p518) target = $region44
      $region43: #{conv_block.3} parent=39 // pred_region
        %p521 = scmp.lt.s32.totalorder %s15, 1
        %s522 = scalar_select %p521, %s15, 1
        %s523 = smul.addr %s522, 32
        %s524 = smul.addr %s523, 4
        %s525 = scalar_lea.vmem %s3, %s524
      $region44: #{conv_block.3} parent=39 // pred_fallthru
        _
    $region40: #{conv_block.3} parent=5 // pred_fallthru
      _
  $region6: #{conv_block.3} parent=0 // loop_footer
    %s13 = sadd.s32 1, %s9
  $region7: #{conv_block.3} parent=0 // loop_footer_branch
    %8 = sbr.rel target = $region3
  $region8: #{conv_block.3} parent=0 // loop_exit
    _

// kernel: conv_block.2
$region0: #{conv_block.2}
  #allocation0 [shape = 'u32[]', space=smem, size = 0x4, offset = 0x4, fixed_abs, tag = 'smem constant byte address 0x4 - core index']
  #allocation1 [shape = 'u32[144,128]{1,0:T(1,128)}', space=vmem, size = 0x12000, scoped, tag = 'internal scratch']
  %s0 = inlined_call_operand.vmem [shape: bf16[2,18,18,128], index: 0, kind: input, shape index: {}]
  %s1 = inlined_call_operand.vmem [shape: bf16[1152,128], index: 1, kind: input, shape index: {}]
  %s2 = inlined_call_operand.vmem [shape: f32[1,128], index: 2, kind: input, shape index: {}]
  %s3 = inlined_call_operand.vmem [shape: bf16[2,256,128], index: 3, kind: output, shape index: {0}]
  %s4 = inlined_call_operand.vmem [shape: f32[2,1,128], index: 4, kind: output, shape index: {1}]
  %s5 = inlined_call_operand.vmem [shape: f32[2,1,128], index: 5, kind: output, shape index: {2}]
  %6 = xla_tuple %s3, %s4, %s5
  %s7 = sld [smem:[#allocation0]]
  $region61: #{conv_block.2} parent=0
    _
  %s9 = ssub.s32 1, %s7
  %s10 = scalar_select 0, %s9, %s7
  loop: start=0, step=1, limit=4
  $region2: #{conv_block.2} parent=0 // loop_pre_header
    _
  $region3: #{conv_block.2} parent=0 // loop_header
    %s12 = sphi 0, %s16
    %p13 = scmp.ge.s32.totalorder %s12, 4
    %s22 = sphi 0, %s24
    %s25 = sphi 0, %s22
    %s26 = sphi 0, %s25
    %s42 = sphi 0, %s26
    %s46 = sphi 0, %s46
    %s48 = sphi 0, %s46
    %s49 = sphi 0, %s48
    %s63 = sphi 0, %s49
    %s67 = sphi 0, %s67
    %s69 = sphi 0, %s67
    %s70 = sphi 0, %s69
    %s84 = sphi 0, %s70
    %s90 = sphi 0, %s92
    %s93 = sphi 0, %s90
    %s94 = sphi 0, %s93
    %s110 = sphi 0, %s94
    %s116 = sphi 0, %s118
    %s119 = sphi 0, %s116
    %s120 = sphi 0, %s119
    %s136 = sphi 0, %s120
    %s142 = sphi 0, %s144
    %s145 = sphi 0, %s142
    %s146 = sphi 0, %s145
    %s162 = sphi 0, %s146
  $region4: #{conv_block.2} parent=0 // loop_header_branch
    %15 = sbr.rel (%p13) target = $region8
  $region5: #{conv_block.2} parent=0 // loop_body
    %s17 = ssub.s32 %s12, 1
    %s18 = ssub.s32 %s12, 2
    %s19 = sadd.s32 %s12, 1
    %s20 = ssub.s32 %s12, %s19
    %p21 = scmp.eq.s32.totalorder %s20, 0
    %s23 = sadd.s32 %s22, 1
    %s24 = scalar_select %p21, %s22, %s23
    %p27 = pneg %p21
    %p28 = scmp.eq.s32.totalorder %s12, 1
    %p29 = por %p27, %p28
    %p30 = scmp.ne.s32.totalorder %s22, %s25
    %p31 = scmp.eq.s32.totalorder %s12, 0
    %p32 = por %p30, %p31
    %p33 = scmp.ne.s32.totalorder %s22, %s25
    %p34 = scmp.eq.s32.totalorder %s17, 1
    %p35 = por %p33, %p34
    %p36 = scmp.ne.s32.totalorder %s25, %s26
    %p37 = scmp.eq.s32.totalorder %s17, 0
    %p38 = por %p36, %p37
    %p39 = scmp.ne.s32.totalorder %s25, %s26
    %p40 = scmp.eq.s32.totalorder %s18, 1
    %p41 = por %p39, %p40
    %p43 = scmp.ne.s32.totalorder %s26, %s42
    %p44 = scmp.eq.s32.totalorder %s18, 0
    %p45 = por %p43, %p44
    %s47 = sadd.s32 %s46, 1
    %p50 = scmp.eq.s32.totalorder %s12, 1
    %p51 = scmp.ne.s32.totalorder %s46, %s48
    %p52 = scmp.eq.s32.totalorder %s12, 0
    %p53 = por %p51, %p52
    %p54 = scmp.ne.s32.totalorder %s46, %s48
    %p55 = scmp.eq.s32.totalorder %s17, 1
    %p56 = por %p54, %p55
    %p57 = scmp.ne.s32.totalorder %s48, %s49
    %p58 = scmp.eq.s32.totalorder %s17, 0
    %p59 = por %p57, %p58
    %p60 = scmp.ne.s32.totalorder %s48, %s49
    %p61 = scmp.eq.s32.totalorder %s18, 1
    %p62 = por %p60, %p61
    %p64 = scmp.ne.s32.totalorder %s49, %s63
    %p65 = scmp.eq.s32.totalorder %s18, 0
    %p66 = por %p64, %p65
    %s68 = sadd.s32 %s67, 1
    %p71 = scmp.eq.s32.totalorder %s12, 1
    %p72 = scmp.ne.s32.totalorder %s67, %s69
    %p73 = scmp.eq.s32.totalorder %s12, 0
    %p74 = por %p72, %p73
    %p75 = scmp.ne.s32.totalorder %s67, %s69
    %p76 = scmp.eq.s32.totalorder %s17, 1
    %p77 = por %p75, %p76
    %p78 = scmp.ne.s32.totalorder %s69, %s70
    %p79 = scmp.eq.s32.totalorder %s17, 0
    %p80 = por %p78, %p79
    %p81 = scmp.ne.s32.totalorder %s69, %s70
    %p82 = scmp.eq.s32.totalorder %s18, 1
    %p83 = por %p81, %p82
    %p85 = scmp.ne.s32.totalorder %s70, %s84
    %p86 = scmp.eq.s32.totalorder %s18, 0
    %p87 = por %p85, %p86
    %s88 = ssub.s32 %s12, %s19
    %p89 = scmp.eq.s32.totalorder %s88, 0
    %s91 = sadd.s32 %s90, 1
    %s92 = scalar_select %p89, %s90, %s91
    %p95 = pneg %p89
    %p96 = scmp.eq.s32.totalorder %s12, 1
    %p97 = por %p95, %p96
    %p98 = scmp.ne.s32.totalorder %s90, %s93
    %p99 = scmp.eq.s32.totalorder %s12, 0
    %p100 = por %p98, %p99
    %p101 = scmp.ne.s32.totalorder %s90, %s93
    %p102 = scmp.eq.s32.totalorder %s17, 1
    %p103 = por %p101, %p102
    %p104 = scmp.ne.s32.totalorder %s93, %s94
    %p105 = scmp.eq.s32.totalorder %s17, 0
    %p106 = por %p104, %p105
    %p107 = scmp.ne.s32.totalorder %s93, %s94
    %p108 = scmp.eq.s32.totalorder %s18, 1
    %p109 = por %p107, %p108
    %p111 = scmp.ne.s32.totalorder %s94, %s110
    %p112 = scmp.eq.s32.totalorder %s18, 0
    %p113 = por %p111, %p112
    %s114 = ssub.s32 %s12, %s19
    %p115 = scmp.eq.s32.totalorder %s114, 0
    %s117 = sadd.s32 %s116, 1
    %s118 = scalar_select %p115, %s116, %s117
    %p121 = pneg %p115
    %p122 = scmp.eq.s32.totalorder %s12, 1
    %p123 = por %p121, %p122
    %p124 = scmp.ne.s32.totalorder %s116, %s119
    %p125 = scmp.eq.s32.totalorder %s12, 0
    %p126 = por %p124, %p125
    %p127 = scmp.ne.s32.totalorder %s116, %s119
    %p128 = scmp.eq.s32.totalorder %s17, 1
    %p129 = por %p127, %p128
    %p130 = scmp.ne.s32.totalorder %s119, %s120
    %p131 = scmp.eq.s32.totalorder %s17, 0
    %p132 = por %p130, %p131
    %p133 = scmp.ne.s32.totalorder %s119, %s120
    %p134 = scmp.eq.s32.totalorder %s18, 1
    %p135 = por %p133, %p134
    %p137 = scmp.ne.s32.totalorder %s120, %s136
    %p138 = scmp.eq.s32.totalorder %s18, 0
    %p139 = por %p137, %p138
    %s140 = ssub.s32 %s12, %s19
    %p141 = scmp.eq.s32.totalorder %s140, 0
    %s143 = sadd.s32 %s142, 1
    %s144 = scalar_select %p141, %s142, %s143
    %p147 = pneg %p141
    %p148 = scmp.eq.s32.totalorder %s12, 1
    %p149 = por %p147, %p148
    %p150 = scmp.ne.s32.totalorder %s142, %s145
    %p151 = scmp.eq.s32.totalorder %s12, 0
    %p152 = por %p150, %p151
    %p153 = scmp.ne.s32.totalorder %s142, %s145
    %p154 = scmp.eq.s32.totalorder %s17, 1
    %p155 = por %p153, %p154
    %p156 = scmp.ne.s32.totalorder %s145, %s146
    %p157 = scmp.eq.s32.totalorder %s17, 0
    %p158 = por %p156, %p157
    %p159 = scmp.ne.s32.totalorder %s145, %s146
    %p160 = scmp.eq.s32.totalorder %s18, 1
    %p161 = por %p159, %p160
    %p163 = scmp.ne.s32.totalorder %s146, %s162
    %p164 = scmp.eq.s32.totalorder %s18, 0
    %p165 = por %p163, %p164
    %p166 = scmp.le.s32.totalorder 1, %s12
    %p167 = scmp.lt.s32.totalorder %s12, 3
    %p168 = pnand %p166, %p167
    %p169 = pneg %p168
    // Predicated region
    $region9: #{conv_block.2} parent=5 // pred_check
      _
    $region10: #{conv_block.2} parent=5 // pred_check_branch
      %171 = sbr.rel (%p168) target = $region12
    $region11: #{conv_block.2} parent=5 // pred_region
      %s172 = ssub.s32 %s12, 1
      // Predicated region
      $region13: #{conv_block.2} parent=11 // pred_check
        %p173 = pneg %p59
      $region14: #{conv_block.2} parent=11 // pred_check_branch
        %175 = sbr.rel (%p173) target = $region16
      $region15: #{conv_block.2} parent=11 // pred_region
        _
      $region16: #{conv_block.2} parent=11 // pred_fallthru
        _
      // Predicated region
      $region17: #{conv_block.2} parent=11 // pred_check
        %p176 = pneg %p80
      $region18: #{conv_block.2} parent=11 // pred_check_branch
        %178 = sbr.rel (%p176) target = $region20
      $region19: #{conv_block.2} parent=11 // pred_region
        _
      $region20: #{conv_block.2} parent=11 // pred_fallthru
        _
    $region12: #{conv_block.2} parent=5 // pred_fallthru
      _
    %p179 = scmp.lt.s32.totalorder %s12, 2
    // Predicated region
    $region21: #{conv_block.2} parent=5 // pred_check
      %p180 = pneg %p179
    $region22: #{conv_block.2} parent=5 // pred_check_branch
      %182 = sbr.rel (%p180) target = $region24
    $region23: #{conv_block.2} parent=5 // pred_region
      // Predicated region
      $region25: #{conv_block.2} parent=23 // pred_check
        %p183 = pneg %p32
      $region26: #{conv_block.2} parent=23 // pred_check_branch
        %185 = sbr.rel (%p183) target = $region28
      $region27: #{conv_block.2} parent=23 // pred_region
        %p186 = scmp.lt.s32.totalorder %s12, 1
        %s187 = scalar_select %p186, %s12, 1
        %s188 = smul.addr %s187, 54
        %s189 = smul.addr %s188, 4
        %s190 = scalar_lea.vmem %s0, %s189
      $region28: #{conv_block.2} parent=23 // pred_fallthru
        _
    $region24: #{conv_block.2} parent=5 // pred_fallthru
      _
    %p191 = scmp.le.s32.totalorder 1, %s12
    %p192 = scmp.lt.s32.totalorder %s12, 3
    %p193 = pnand %p191, %p192
    %p194 = pneg %p193
    // Predicated region
    $region29: #{conv_block.2} parent=5 // pred_check
      _
    $region30: #{conv_block.2} parent=5 // pred_check_branch
      %196 = sbr.rel (%p193) target = $region32
    $region31: #{conv_block.2} parent=5 // pred_region
      %s197 = ssub.s32 %s12, 1
      %p198 = scmp.lt.s32.totalorder %s17, 1
      %s199 = scalar_select %p198, %s17, 1
      %s200 = smul.addr %s199, 54
      %s201 = smul.addr %s200, 4
      %s202 = scalar_lea.vmem %s0, %s201
      %p203 = pneg %p38
      %p204 = pneg %p35
      %p205 = pneg %p59
      %p206 = pneg %p56
      %p207 = pneg %p80
      %p208 = pneg %p77
      %p209 = pneg %p106
      %p210 = pneg %p103
      %p211 = scmp.lt.s32.totalorder %s17, 1
      %s212 = scalar_select %p211, %s17, 1
      %s213 = smul.addr %s212, 32
      %s214 = smul.addr %s213, 4
      %s215 = scalar_lea.vmem %s3, %s214
      %p216 = pneg %p132
      %p217 = pneg %p129
      %p218 = scmp.lt.s32.totalorder %s17, 1
      %s219 = scalar_select %p218, %s17, 1
      %s220 = scalar_lea.vmem %s4, %s219
      %p221 = pneg %p158
      %p222 = pneg %p155
      %p223 = scmp.lt.s32.totalorder %s17, 1
      %s224 = scalar_select %p223, %s17, 1
      %s225 = scalar_lea.vmem %s5, %s224
      %p226 = scmp.lt.s32.totalorder %s17, 1
      %s227 = scalar_select %p226, %s17, 1
      %s228 = smul.addr %s227, 54
      %s229 = smul.addr %s228, 4
      %s230 = scalar_lea.vmem %s0, %s229
      %p231 = scmp.lt.s32.totalorder %s17, 1
      %s232 = scalar_select %p231, %s17, 1
      %s233 = smul.addr %s232, 32
      %s234 = smul.addr %s233, 4
      %s235 = scalar_lea.vmem %s3, %s234
      %p236 = scmp.lt.s32.totalorder %s17, 1
      %s237 = scalar_select %p236, %s17, 1
      %s238 = scalar_lea.vmem %s4, %s237
      %p239 = scmp.lt.s32.totalorder %s17, 1
      %s240 = scalar_select %p239, %s17, 1
      %s241 = scalar_lea.vmem %s5, %s240
      %v243 = vld [vmem:[%s230] sm:$0xf]
      %v244 = vld [vmem:[%s230 + $0x4] sm:$0xf]
      %v245 = vld [vmem:[%s230 + $0x8] sm:$0x1]
      %v246 = vld [vmem:[%s230 + $0xc] sm:$0xf]
      %v247 = vld [vmem:[%s230 + $0x10] sm:$0xf]
      %v248 = vld [vmem:[%s230 + $0x14] sm:$0x1]
      %v249 = vld [vmem:[%s230 + $0x18] sm:$0xf]
      %v250 = vld [vmem:[%s230 + $0x1c] sm:$0xf]
      %v251 = vld [vmem:[%s230 + $0x20] sm:$0x1]
      %v252 = vld [vmem:[%s230 + $0x24] sm:$0xf]
      %v253 = vld [vmem:[%s230 + $0x28] sm:$0xf]
      %v254 = vld [vmem:[%s230 + $0x2c] sm:$0x1]
      %v255 = vld [vmem:[%s230 + $0x30] sm:$0xf]
      %v256 = vld [vmem:[%s230 + $0x34] sm:$0xf]
      %v257 = vld [vmem:[%s230 + $0x38] sm:$0x1]
      %v258 = vld [vmem:[%s230 + $0x3c] sm:$0xf]
      %v259 = vld [vmem:[%s230 + $0x40] sm:$0xf]
      %v260 = vld [vmem:[%s230 + $0x44] sm:$0x1]
      %v261 = vld [vmem:[%s230 + $0x48] sm:$0xf]
      %v262 = vld [vmem:[%s230 + $0x4c] sm:$0xf]
      %v263 = vld [vmem:[%s230 + $0x50] sm:$0x1]
      %v264 = vld [vmem:[%s230 + $0x54] sm:$0xf]
      %v265 = vld [vmem:[%s230 + $0x58] sm:$0xf]
      %v266 = vld [vmem:[%s230 + $0x5c] sm:$0x1]
      %v267 = vld [vmem:[%s230 + $0x60] sm:$0xf]
      %v268 = vld [vmem:[%s230 + $0x64] sm:$0xf]
      %v269 = vld [vmem:[%s230 + $0x68] sm:$0x1]
      %v270 = vld [vmem:[%s230 + $0x6c] sm:$0xf]
      %v271 = vld [vmem:[%s230 + $0x70] sm:$0xf]
      %v272 = vld [vmem:[%s230 + $0x74] sm:$0x1]
      %v273 = vld [vmem:[%s230 + $0x78] sm:$0xf]
      %v274 = vld [vmem:[%s230 + $0x7c] sm:$0xf]
      %v275 = vld [vmem:[%s230 + $0x80] sm:$0x1]
      %v276 = vld [vmem:[%s230 + $0x84] sm:$0xf]
      %v277 = vld [vmem:[%s230 + $0x88] sm:$0xf]
      %v278 = vld [vmem:[%s230 + $0x8c] sm:$0x1]
      %v279 = vld [vmem:[%s230 + $0x90] sm:$0xf]
      %v280 = vld [vmem:[%s230 + $0x94] sm:$0xf]
      %v281 = vld [vmem:[%s230 + $0x98] sm:$0x1]
      %v282 = vld [vmem:[%s230 + $0x9c] sm:$0xf]
      %v283 = vld [vmem:[%s230 + $0xa0] sm:$0xf]
      %v284 = vld [vmem:[%s230 + $0xa4] sm:$0x1]
      %v285 = vld [vmem:[%s230 + $0xa8] sm:$0xf]
      %v286 = vld [vmem:[%s230 + $0xac] sm:$0xf]
      %v287 = vld [vmem:[%s230 + $0xb0] sm:$0x1]
      %v288 = vld [vmem:[%s230 + $0xb4] sm:$0xf]
      %v289 = vld [vmem:[%s230 + $0xb8] sm:$0xf]
      %v290 = vld [vmem:[%s230 + $0xbc] sm:$0x1]
      %v291 = vld [vmem:[%s230 + $0xc0] sm:$0xf]
      %v292 = vld [vmem:[%s230 + $0xc4] sm:$0xf]
      %v293 = vld [vmem:[%s230 + $0xc8] sm:$0x1]
      %v294 = vld [vmem:[%s230 + $0xcc] sm:$0xf]
      %v295 = vld [vmem:[%s230 + $0xd0] sm:$0xf]
      %v296 = vld [vmem:[%s230 + $0xd4] sm:$0x1]
      %vm297 = vsmask.f32 3328
      %vm298 = vsmask.f32 7440
      %vm299 = vmor %vm297, %vm298
      %v301 = vshrl.u32 %v243, 16
      %v303 = vrot.slane %v301, 4
      %v304 = vshll.u32 %v243, 16
      %v306 = vrot.slane %v304, 5
      %v307 = vor.u32 %v303, %v306
      %v308 = vrot.slane %v307, 4
      %v310 = vshll.u32 %v244, 16
      %v312 = vrot.slane %v310, 5
      %v313 = vsel %vm299, %v308, %v312
      %v314 = vshrl.u32 %v244, 16
      %v316 = vrot.slane %v314, 4
      %v317 = vor.u32 %v316, %v312
      %v318 = vrot.slane %v317, 4
      %v320 = vshll.u32 %v245, 16
      %v322 = vrot.slane %v320, 5
      %v323 = vsel %vm299, %v318, %v322
      %v325 = vshrl.u32 %v246, 16
      %v327 = vrot.slane %v325, 4
      %v328 = vshll.u32 %v246, 16
      %v330 = vrot.slane %v328, 5
      %v331 = vor.u32 %v327, %v330
      %v332 = vrot.slane %v331, 4
      %v334 = vshll.u32 %v247, 16
      %v336 = vrot.slane %v334, 5
      %v337 = vsel %vm299, %v332, %v336
      %v338 = vshrl.u32 %v247, 16
      %v340 = vrot.slane %v338, 4
      %v341 = vor.u32 %v340, %v336
      %v342 = vrot.slane %v341, 4
      %v344 = vshll.u32 %v248, 16
      %v346 = vrot.slane %v344, 5
      %v347 = vsel %vm299, %v342, %v346
      %v349 = vshrl.u32 %v249, 16
      %v351 = vrot.slane %v349, 4
      %v352 = vshll.u32 %v249, 16
      %v354 = vrot.slane %v352, 5
      %v355 = vor.u32 %v351, %v354
      %v356 = vrot.slane %v355, 4
      %v358 = vshll.u32 %v250, 16
      %v360 = vrot.slane %v358, 5
      %v361 = vsel %vm299, %v356, %v360
      %v362 = vshrl.u32 %v250, 16
      %v364 = vrot.slane %v362, 4
      %v365 = vor.u32 %v364, %v360
      %v366 = vrot.slane %v365, 4
      %v368 = vshll.u32 %v251, 16
      %v370 = vrot.slane %v368, 5
      %v371 = vsel %vm299, %v366, %v370
      %v373 = vshrl.u32 %v252, 16
      %v375 = vrot.slane %v373, 4
      %v376 = vshll.u32 %v252, 16
      %v378 = vrot.slane %v376, 5
      %v379 = vor.u32 %v375, %v378
      %v380 = vrot.slane %v379, 4
      %v382 = vshll.u32 %v253, 16
      %v384 = vrot.slane %v382, 5
      %v385 = vsel %vm299, %v380, %v384
      %v386 = vshrl.u32 %v253, 16
      %v388 = vrot.slane %v386, 4
      %v389 = vor.u32 %v388, %v384
      %v390 = vrot.slane %v389, 4
      %v392 = vshll.u32 %v254, 16
      %v394 = vrot.slane %v392, 5
      %v395 = vsel %vm299, %v390, %v394
      %v397 = vshrl.u32 %v255, 16
      %v399 = vrot.slane %v397, 4
      %v400 = vshll.u32 %v255, 16
      %v402 = vrot.slane %v400, 5
      %v403 = vor.u32 %v399, %v402
      %v404 = vrot.slane %v403, 4
      %v406 = vshll.u32 %v256, 16
      %v408 = vrot.slane %v406, 5
      %v409 = vsel %vm299, %v404, %v408
      %v410 = vshrl.u32 %v256, 16
      %v412 = vrot.slane %v410, 4
      %v413 = vor.u32 %v412, %v408
      %v414 = vrot.slane %v413, 4
      %v416 = vshll.u32 %v257, 16
      %v418 = vrot.slane %v416, 5
      %v419 = vsel %vm299, %v414, %v418
      %v421 = vshrl.u32 %v258, 16
      %v423 = vrot.slane %v421, 4
      %v424 = vshll.u32 %v258, 16
      %v426 = vrot.slane %v424, 5
      %v427 = vor.u32 %v423, %v426
      %v428 = vrot.slane %v427, 4
      %v430 = vshll.u32 %v259, 16
      %v432 = vrot.slane %v430, 5
      %v433 = vsel %vm299, %v428, %v432
      %v434 = vshrl.u32 %v259, 16
      %v436 = vrot.slane %v434, 4
      %v437 = vor.u32 %v436, %v432
      %v438 = vrot.slane %v437, 4
      %v440 = vshll.u32 %v260, 16
      %v442 = vrot.slane %v440, 5
      %v443 = vsel %vm299, %v438, %v442
      %v445 = vshrl.u32 %v261, 16
      %v447 = vrot.slane %v445, 4
      %v448 = vshll.u32 %v261, 16
      %v450 = vrot.slane %v448, 5
      %v451 = vor.u32 %v447, %v450
      %v452 = vrot.slane %v451, 4
      %v454 = vshll.u32 %v262, 16
      %v456 = vrot.slane %v454, 5
      %v457 = vsel %vm299, %v452, %v456
      %v458 = vshrl.u32 %v262, 16
      %v460 = vrot.slane %v458, 4
      %v461 = vor.u32 %v460, %v456
      %v462 = vrot.slane %v461, 4
      %v464 = vshll.u32 %v263, 16
      %v466 = vrot.slane %v464, 5
      %v467 = vsel %vm299, %v462, %v466
      %v469 = vshrl.u32 %v264, 16
      %v471 = vrot.slane %v469, 4
      %v472 = vshll.u32 %v264, 16
      %v474 = vrot.slane %v472, 5
      %v475 = vor.u32 %v471, %v474
      %v476 = vrot.slane %v475, 4
      %v478 = vshll.u32 %v265, 16
      %v480 = vrot.slane %v478, 5
      %v481 = vsel %vm299, %v476, %v480
      %v482 = vshrl.u32 %v265, 16
      %v484 = vrot.slane %v482, 4
      %v485 = vor.u32 %v484, %v480
      %v486 = vrot.slane %v485, 4
      %v488 = vshll.u32 %v266, 16
      %v490 = vrot.slane %v488, 5
      %v491 = vsel %vm299, %v486, %v490
      %v493 = vshrl.u32 %v267, 16
      %v495 = vrot.slane %v493, 4
      %v496 = vshll.u32 %v267, 16
      %v498 = vrot.slane %v496, 5
      %v499 = vor.u32 %v495, %v498
      %v500 = vrot.slane %v499, 4
      %v502 = vshll.u32 %v268, 16
      %v504 = vrot.slane %v502, 5
      %v505 = vsel %vm299, %v500, %v504
      %v506 = vshrl.u32 %v268, 16
      %v508 = vrot.slane %v506, 4
      %v509 = vor.u32 %v508, %v504
      %v510 = vrot.slane %v509, 4
      %v512 = vshll.u32 %v269, 16
      %v514 = vrot.slane %v512, 5
      %v515 = vsel %vm299, %v510, %v514
      %v517 = vshrl.u32 %v270, 16
      %v519 = vrot.slane %v517, 4
      %v520 = vshll.u32 %v270, 16
      %v522 = vrot.slane %v520, 5
      %v523 = vor.u32 %v519, %v522
      %v524 = vrot.slane %v523, 4
      %v526 = vshll.u32 %v271, 16
      %v528 = vrot.slane %v526, 5
      %v529 = vsel %vm299, %v524, %v528
      %v530 = vshrl.u32 %v271, 16
      %v532 = vrot.slane %v530, 4
      %v533 = vor.u32 %v532, %v528
      %v534 = vrot.slane %v533, 4
      %v536 = vshll.u32 %v272, 16
      %v538 = vrot.slane %v536, 5
      %v539 = vsel %vm299, %v534, %v538
      %v541 = vshrl.u32 %v273, 16
      %v543 = vrot.slane %v541, 4
      %v544 = vshll.u32 %v273, 16
      %v546 = vrot.slane %v544, 5
      %v547 = vor.u32 %v543, %v546
      %v548 = vrot.slane %v547, 4
      %v550 = vshll.u32 %v274, 16
      %v552 = vrot.slane %v550, 5
      %v553 = vsel %vm299, %v548, %v552
      %v554 = vshrl.u32 %v274, 16
      %v556 = vrot.slane %v554, 4
      %v557 = vor.u32 %v556, %v552
      %v558 = vrot.slane %v557, 4
      %v560 = vshll.u32 %v275, 16
      %v562 = vrot.slane %v560, 5
      %v563 = vsel %vm299, %v558, %v562
      %v565 = vshrl.u32 %v276, 16
      %v567 = vrot.slane %v565, 4
      %v568 = vshll.u32 %v276, 16
      %v570 = vrot.slane %v568, 5
      %v571 = vor.u32 %v567, %v570
      %v572 = vrot.slane %v571, 4
      %v574 = vshll.u32 %v277, 16
      %v576 = vrot.slane %v574, 5
      %v577 = vsel %vm299, %v572, %v576
      %v578 = vshrl.u32 %v277, 16
      %v580 = vrot.slane %v578, 4
      %v581 = vor.u32 %v580, %v576
      %v582 = vrot.slane %v581, 4
      %v584 = vshll.u32 %v278, 16
      %v586 = vrot.slane %v584, 5
      %v587 = vsel %vm299, %v582, %v586
      %v589 = vshrl.u32 %v279, 16
      %v591 = vrot.slane %v589, 4
      %v592 = vshll.u32 %v279, 16
      %v594 = vrot.slane %v592, 5
      %v595 = vor.u32 %v591, %v594
      %v596 = vrot.slane %v595, 4
      %v598 = vshll.u32 %v280, 16
      %v600 = vrot.slane %v598, 5
      %v601 = vsel %vm299, %v596, %v600
      %v602 = vshrl.u32 %v280, 16
      %v604 = vrot.slane %v602, 4
      %v605 = vor.u32 %v604, %v600
      %v606 = vrot.slane %v605, 4
      %v608 = vshll.u32 %v281, 16
      %v610 = vrot.slane %v608, 5
      %v611 = vsel %vm299, %v606, %v610
      %v613 = vshrl.u32 %v282, 16
      %v615 = vrot.slane %v613, 4
      %v616 = vshll.u32 %v282, 16
      %v618 = vrot.slane %v616, 5
      %v619 = vor.u32 %v615, %v618
      %v620 = vrot.slane %v619, 4
      %v622 = vshll.u32 %v283, 16
      %v624 = vrot.slane %v622, 5
      %v625 = vsel %vm299, %v620, %v624
      %v626 = vshrl.u32 %v283, 16
      %v628 = vrot.slane %v626, 4
      %v629 = vor.u32 %v628, %v624
      %v630 = vrot.slane %v629, 4
      %v632 = vshll.u32 %v284, 16
      %v634 = vrot.slane %v632, 5
      %v635 = vsel %vm299, %v630, %v634
      %v637 = vshrl.u32 %v285, 16
      %v639 = vrot.slane %v637, 4
      %v640 = vshll.u32 %v285, 16
      %v642 = vrot.slane %v640, 5
      %v643 = vor.u32 %v639, %v642
      %v644 = vrot.slane %v643, 4
      %v646 = vshll.u32 %v286, 16
      %v648 = vrot.slane %v646, 5
      %v649 = vsel %vm299, %v644, %v648
      %v650 = vshrl.u32 %v286, 16
      %v652 = vrot.slane %v650, 4
      %v653 = vor.u32 %v652, %v648
      %v654 = vrot.slane %v653, 4
      %v656 = vshll.u32 %v287, 16
      %v658 = vrot.slane %v656, 5
      %v659 = vsel %vm299, %v654, %v658
      %v661 = vshrl.u32 %v288, 16
      %v663 = vrot.slane %v661, 4
      %v664 = vshll.u32 %v288, 16
      %v666 = vrot.slane %v664, 5
      %v667 = vor.u32 %v663, %v666
      %v668 = vrot.slane %v667, 4
      %v670 = vshll.u32 %v289, 16
      %v672 = vrot.slane %v670, 5
      %v673 = vsel %vm299, %v668, %v672
      %v674 = vshrl.u32 %v289, 16
      %v676 = vrot.slane %v674, 4
      %v677 = vor.u32 %v676, %v672
      %v678 = vrot.slane %v677, 4
      %v680 = vshll.u32 %v290, 16
      %v682 = vrot.slane %v680, 5
      %v683 = vsel %vm299, %v678, %v682
      %vm732 = vcmask 1042432
      %vm733 = vcmask 1046532
      %vm734 = vmor %vm732, %vm733
      %v735 = vrot.slane %v243, 5
      %v736 = vrot.slane %v735, 4
      %v737 = vrot.slane %v244, 5
      %v738 = vsel %vm734, %v736, %v737
      %v739 = vrot.slane %v737, 4
      %v740 = vrot.slane %v245, 5
      %v741 = vsel %vm734, %v739, %v740
      %v742 = vrot.slane %v246, 5
      %v743 = vrot.slane %v742, 4
      %v744 = vrot.slane %v247, 5
      %v745 = vsel %vm734, %v743, %v744
      %v746 = vrot.slane %v744, 4
      %v747 = vrot.slane %v248, 5
      %v748 = vsel %vm734, %v746, %v747
      %v749 = vrot.slane %v249, 5
      %v750 = vrot.slane %v749, 4
      %v751 = vrot.slane %v250, 5
      %v752 = vsel %vm734, %v750, %v751
      %v753 = vrot.slane %v751, 4
      %v754 = vrot.slane %v251, 5
      %v755 = vsel %vm734, %v753, %v754
      %v756 = vrot.slane %v252, 5
      %v757 = vrot.slane %v756, 4
      %v758 = vrot.slane %v253, 5
      %v759 = vsel %vm734, %v757, %v758
      %v760 = vrot.slane %v758, 4
      %v761 = vrot.slane %v254, 5
      %v762 = vsel %vm734, %v760, %v761
      %v763 = vrot.slane %v255, 5
      %v764 = vrot.slane %v763, 4
      %v765 = vrot.slane %v256, 5
      %v766 = vsel %vm734, %v764, %v765
      %v767 = vrot.slane %v765, 4
      %v768 = vrot.slane %v257, 5
      %v769 = vsel %vm734, %v767, %v768
      %v770 = vrot.slane %v258, 5
      %v771 = vrot.slane %v770, 4
      %v772 = vrot.slane %v259, 5
      %v773 = vsel %vm734, %v771, %v772
      %v774 = vrot.slane %v772, 4
      %v775 = vrot.slane %v260, 5
      %v776 = vsel %vm734, %v774, %v775
      %v777 = vrot.slane %v261, 5
      %v778 = vrot.slane %v777, 4
      %v779 = vrot.slane %v262, 5
      %v780 = vsel %vm734, %v778, %v779
      %v781 = vrot.slane %v779, 4
      %v782 = vrot.slane %v263, 5
      %v783 = vsel %vm734, %v781, %v782
      %v784 = vrot.slane %v264, 5
      %v785 = vrot.slane %v784, 4
      %v786 = vrot.slane %v265, 5
      %v787 = vsel %vm734, %v785, %v786
      %v788 = vrot.slane %v786, 4
      %v789 = vrot.slane %v266, 5
      %v790 = vsel %vm734, %v788, %v789
      %v791 = vrot.slane %v267, 5
      %v792 = vrot.slane %v791, 4
      %v793 = vrot.slane %v268, 5
      %v794 = vsel %vm734, %v792, %v793
      %v795 = vrot.slane %v793, 4
      %v796 = vrot.slane %v269, 5
      %v797 = vsel %vm734, %v795, %v796
      %v798 = vrot.slane %v270, 5
      %v799 = vrot.slane %v798, 4
      %v800 = vrot.slane %v271, 5
      %v801 = vsel %vm734, %v799, %v800
      %v802 = vrot.slane %v800, 4
      %v803 = vrot.slane %v272, 5
      %v804 = vsel %vm734, %v802, %v803
      %v805 = vrot.slane %v273, 5
      %v806 = vrot.slane %v805, 4
      %v807 = vrot.slane %v274, 5
      %v808 = vsel %vm734, %v806, %v807
      %v809 = vrot.slane %v807, 4
      %v810 = vrot.slane %v275, 5
      %v811 = vsel %vm734, %v809, %v810
      %v812 = vrot.slane %v276, 5
      %v813 = vrot.slane %v812, 4
      %v814 = vrot.slane %v277, 5
      %v815 = vsel %vm734, %v813, %v814
      %v816 = vrot.slane %v814, 4
      %v817 = vrot.slane %v278, 5
      %v818 = vsel %vm734, %v816, %v817
      %v819 = vrot.slane %v279, 5
      %v820 = vrot.slane %v819, 4
      %v821 = vrot.slane %v280, 5
      %v822 = vsel %vm734, %v820, %v821
      %v823 = vrot.slane %v821, 4
      %v824 = vrot.slane %v281, 5
      %v825 = vsel %vm734, %v823, %v824
      %v826 = vrot.slane %v282, 5
      %v827 = vrot.slane %v826, 4
      %v828 = vrot.slane %v283, 5
      %v829 = vsel %vm734, %v827, %v828
      %v830 = vrot.slane %v828, 4
      %v831 = vrot.slane %v284, 5
      %v832 = vsel %vm734, %v830, %v831
      %v833 = vrot.slane %v285, 5
      %v834 = vrot.slane %v833, 4
      %v835 = vrot.slane %v286, 5
      %v836 = vsel %vm734, %v834, %v835
      %v837 = vrot.slane %v835, 4
      %v838 = vrot.slane %v287, 5
      %v839 = vsel %vm734, %v837, %v838
      %v840 = vrot.slane %v288, 5
      %v841 = vrot.slane %v840, 4
      %v842 = vrot.slane %v289, 5
      %v843 = vsel %vm734, %v841, %v842
      %v844 = vrot.slane %v842, 4
      %v845 = vrot.slane %v290, 5
      %v846 = vsel %vm734, %v844, %v845
      %v848 = vshrl.u32 %v291, 16
      %v850 = vrot.slane %v848, 4
      %v851 = vshll.u32 %v291, 16
      %v853 = vrot.slane %v851, 5
      %v854 = vor.u32 %v850, %v853
      %v855 = vrot.slane %v854, 4
      %v857 = vshll.u32 %v292, 16
      %v859 = vrot.slane %v857, 5
      %v860 = vsel %vm299, %v855, %v859
      %v861 = vshrl.u32 %v292, 16
      %v863 = vrot.slane %v861, 4
      %v864 = vor.u32 %v863, %v859
      %v865 = vrot.slane %v864, 4
      %v867 = vshll.u32 %v293, 16
      %v869 = vrot.slane %v867, 5
      %v870 = vsel %vm299, %v865, %v869
      %v874 = vrot.slane %v291, 5
      %v875 = vrot.slane %v874, 4
      %v876 = vrot.slane %v292, 5
      %v877 = vsel %vm734, %v875, %v876
      %v878 = vrot.slane %v876, 4
      %v879 = vrot.slane %v293, 5
      %v880 = vsel %vm734, %v878, %v879
      %v882 = vshrl.u32 %v294, 16
      %v884 = vrot.slane %v882, 4
      %v885 = vshll.u32 %v294, 16
      %v887 = vrot.slane %v885, 5
      %v888 = vor.u32 %v884, %v887
      %v889 = vrot.slane %v888, 4
      %v891 = vshll.u32 %v295, 16
      %v893 = vrot.slane %v891, 5
      %v894 = vsel %vm299, %v889, %v893
      %v895 = vshrl.u32 %v295, 16
      %v897 = vrot.slane %v895, 4
      %v898 = vor.u32 %v897, %v893
      %v899 = vrot.slane %v898, 4
      %v901 = vshll.u32 %v296, 16
      %v903 = vrot.slane %v901, 5
      %v904 = vsel %vm299, %v899, %v903
      %v908 = vrot.slane %v294, 5
      %v909 = vrot.slane %v908, 4
      %v910 = vrot.slane %v295, 5
      %v911 = vsel %vm734, %v909, %v910
      %v912 = vrot.slane %v910, 4
      %v913 = vrot.slane %v296, 5
      %v914 = vsel %vm734, %v912, %v913
      %v915 = vunpack.c.l.b16 %v243
      %v916 = vunpack.c.l.b16 %v244
      %v917 = vunpack.c.l.b16 %v246
      %v918 = vunpack.c.l.b16 %v247
      %v919 = vunpack.c.l.b16 %v249
      %v920 = vunpack.c.l.b16 %v250
      %v921 = vunpack.c.l.b16 %v252
      %v922 = vunpack.c.l.b16 %v253
      %v923 = vunpack.c.l.b16 %v255
      %v924 = vunpack.c.l.b16 %v256
      %v925 = vunpack.c.l.b16 %v258
      %v926 = vunpack.c.l.b16 %v259
      %v927 = vunpack.c.l.b16 %v261
      %v928 = vunpack.c.l.b16 %v262
      %v929 = vunpack.c.l.b16 %v264
      %v930 = vunpack.c.l.b16 %v265
      %v931 = vunpack.c.l.b16 %v267
      %v932 = vunpack.c.l.b16 %v268
      %v933 = vunpack.c.l.b16 %v270
      %v934 = vunpack.c.l.b16 %v271
      %v935 = vunpack.c.l.b16 %v273
      %v936 = vunpack.c.l.b16 %v274
      %v937 = vunpack.c.l.b16 %v276
      %v938 = vunpack.c.l.b16 %v277
      %v939 = vunpack.c.l.b16 %v279
      %v940 = vunpack.c.l.b16 %v280
      %v941 = vunpack.c.l.b16 %v282
      %v942 = vunpack.c.l.b16 %v283
      %v943 = vunpack.c.l.b16 %v285
      %v944 = vunpack.c.l.b16 %v286
      %v945 = vunpack.c.l.b16 %v288
      %v946 = vunpack.c.l.b16 %v289
      %v947 = vpack.c.b16 %v916, %v915
      %v948 = vpack.c.b16 %v918, %v917
      %v949 = vpack.c.b16 %v920, %v919
      %v950 = vpack.c.b16 %v922, %v921
      %v951 = vpack.c.b16 %v924, %v923
      %v952 = vpack.c.b16 %v926, %v925
      %v953 = vpack.c.b16 %v928, %v927
      %v954 = vpack.c.b16 %v930, %v929
      %v955 = vpack.c.b16 %v932, %v931
      %v956 = vpack.c.b16 %v934, %v933
      %v957 = vpack.c.b16 %v936, %v935
      %v958 = vpack.c.b16 %v938, %v937
      %v959 = vpack.c.b16 %v940, %v939
      %v960 = vpack.c.b16 %v942, %v941
      %v961 = vpack.c.b16 %v944, %v943
      %v962 = vpack.c.b16 %v946, %v945
      %v979 = vunpack.c.l.b16 %v313
      %v980 = vunpack.c.l.b16 %v323
      %v981 = vunpack.c.l.b16 %v337
      %v982 = vunpack.c.l.b16 %v347
      %v983 = vunpack.c.l.b16 %v361
      %v984 = vunpack.c.l.b16 %v371
      %v985 = vunpack.c.l.b16 %v385
      %v986 = vunpack.c.l.b16 %v395
      %v987 = vunpack.c.l.b16 %v409
      %v988 = vunpack.c.l.b16 %v419
      %v989 = vunpack.c.l.b16 %v433
      %v990 = vunpack.c.l.b16 %v443
      %v991 = vunpack.c.l.b16 %v457
      %v992 = vunpack.c.l.b16 %v467
      %v993 = vunpack.c.l.b16 %v481
      %v994 = vunpack.c.l.b16 %v491
      %v995 = vunpack.c.l.b16 %v505
      %v996 = vunpack.c.l.b16 %v515
      %v997 = vunpack.c.l.b16 %v529
      %v998 = vunpack.c.l.b16 %v539
      %v999 = vunpack.c.l.b16 %v553
      %v1000 = vunpack.c.l.b16 %v563
      %v1001 = vunpack.c.l.b16 %v577
      %v1002 = vunpack.c.l.b16 %v587
      %v1003 = vunpack.c.l.b16 %v601
      %v1004 = vunpack.c.l.b16 %v611
      %v1005 = vunpack.c.l.b16 %v625
      %v1006 = vunpack.c.l.b16 %v635
      %v1007 = vunpack.c.l.b16 %v649
      %v1008 = vunpack.c.l.b16 %v659
      %v1009 = vunpack.c.l.b16 %v673
      %v1010 = vunpack.c.l.b16 %v683
      %v1011 = vpack.c.b16 %v980, %v979
      %v1012 = vpack.c.b16 %v982, %v981
      %v1013 = vpack.c.b16 %v984, %v983
      %v1014 = vpack.c.b16 %v986, %v985
      %v1015 = vpack.c.b16 %v988, %v987
      %v1016 = vpack.c.b16 %v990, %v989
      %v1017 = vpack.c.b16 %v992, %v991
      %v1018 = vpack.c.b16 %v994, %v993
      %v1019 = vpack.c.b16 %v996, %v995
      %v1020 = vpack.c.b16 %v998, %v997
      %v1021 = vpack.c.b16 %v1000, %v999
      %v1022 = vpack.c.b16 %v1002, %v1001
      %v1023 = vpack.c.b16 %v1004, %v1003
      %v1024 = vpack.c.b16 %v1006, %v1005
      %v1025 = vpack.c.b16 %v1008, %v1007
      %v1026 = vpack.c.b16 %v1010, %v1009
      %v1043 = vunpack.c.l.b16 %v738
      %v1044 = vunpack.c.l.b16 %v741
      %v1045 = vunpack.c.l.b16 %v745
      %v1046 = vunpack.c.l.b16 %v748
      %v1047 = vunpack.c.l.b16 %v752
      %v1048 = vunpack.c.l.b16 %v755
      %v1049 = vunpack.c.l.b16 %v759
      %v1050 = vunpack.c.l.b16 %v762
      %v1051 = vunpack.c.l.b16 %v766
      %v1052 = vunpack.c.l.b16 %v769
      %v1053 = vunpack.c.l.b16 %v773
      %v1054 = vunpack.c.l.b16 %v776
      %v1055 = vunpack.c.l.b16 %v780
      %v1056 = vunpack.c.l.b16 %v783
      %v1057 = vunpack.c.l.b16 %v787
      %v1058 = vunpack.c.l.b16 %v790
      %v1059 = vunpack.c.l.b16 %v794
      %v1060 = vunpack.c.l.b16 %v797
      %v1061 = vunpack.c.l.b16 %v801
      %v1062 = vunpack.c.l.b16 %v804
      %v1063 = vunpack.c.l.b16 %v808
      %v1064 = vunpack.c.l.b16 %v811
      %v1065 = vunpack.c.l.b16 %v815
      %v1066 = vunpack.c.l.b16 %v818
      %v1067 = vunpack.c.l.b16 %v822
      %v1068 = vunpack.c.l.b16 %v825
      %v1069 = vunpack.c.l.b16 %v829
      %v1070 = vunpack.c.l.b16 %v832
      %v1071 = vunpack.c.l.b16 %v836
      %v1072 = vunpack.c.l.b16 %v839
      %v1073 = vunpack.c.l.b16 %v843
      %v1074 = vunpack.c.l.b16 %v846
      %v1075 = vpack.c.b16 %v1044, %v1043
      %v1076 = vpack.c.b16 %v1046, %v1045
      %v1077 = vpack.c.b16 %v1048, %v1047
      %v1078 = vpack.c.b16 %v1050, %v1049
      %v1079 = vpack.c.b16 %v1052, %v1051
      %v1080 = vpack.c.b16 %v1054, %v1053
      %v1081 = vpack.c.b16 %v1056, %v1055
      %v1082 = vpack.c.b16 %v1058, %v1057
      %v1083 = vpack.c.b16 %v1060, %v1059
      %v1084 = vpack.c.b16 %v1062, %v1061
      %v1085 = vpack.c.b16 %v1064, %v1063
      %v1086 = vpack.c.b16 %v1066, %v1065
      %v1087 = vpack.c.b16 %v1068, %v1067
      %v1088 = vpack.c.b16 %v1070, %v1069
      %v1089 = vpack.c.b16 %v1072, %v1071
      %v1090 = vpack.c.b16 %v1074, %v1073
      %v1107 = vunpack.c.l.b16 %v291
      %v1108 = vunpack.c.l.b16 %v292
      %v1109 = vpack.c.b16 %v1108, %v1107
      %v1111 = vunpack.c.l.b16 %v860
      %v1112 = vunpack.c.l.b16 %v870
      %v1113 = vpack.c.b16 %v1112, %v1111
      %v1115 = vunpack.c.l.b16 %v877
      %v1116 = vunpack.c.l.b16 %v880
      %v1117 = vpack.c.b16 %v1116, %v1115
      %v1119 = vunpack.c.l.b16 %v294
      %v1120 = vunpack.c.l.b16 %v295
      %v1121 = vpack.c.b16 %v1120, %v1119
      %v1123 = vunpack.c.l.b16 %v894
      %v1124 = vunpack.c.l.b16 %v904
      %v1125 = vpack.c.b16 %v1124, %v1123
      %v1127 = vunpack.c.l.b16 %v911
      %v1128 = vunpack.c.l.b16 %v914
      %v1129 = vpack.c.b16 %v1128, %v1127
      %v1131 = vld [vmem:[%s1] sm:$0xf]
      %v1132 = vld [vmem:[%s1 + $0x4] sm:$0xf]
      %v1133 = vld [vmem:[%s1 + $0x8] sm:$0xf]
      %v1134 = vld [vmem:[%s1 + $0xc] sm:$0xf]
      %v1135 = vld [vmem:[%s1 + $0x10] sm:$0xf]
      %v1136 = vld [vmem:[%s1 + $0x14] sm:$0xf]
      %v1137 = vld [vmem:[%s1 + $0x18] sm:$0xf]
      %v1138 = vld [vmem:[%s1 + $0x1c] sm:$0xf]
      %v1139 = vld [vmem:[%s1 + $0x20] sm:$0xf]
      %v1140 = vld [vmem:[%s1 + $0x24] sm:$0xf]
      %v1141 = vld [vmem:[%s1 + $0x28] sm:$0xf]
      %v1142 = vld [vmem:[%s1 + $0x2c] sm:$0xf]
      %v1143 = vld [vmem:[%s1 + $0x30] sm:$0xf]
      %v1144 = vld [vmem:[%s1 + $0x34] sm:$0xf]
      %v1145 = vld [vmem:[%s1 + $0x38] sm:$0xf]
      %v1146 = vld [vmem:[%s1 + $0x3c] sm:$0xf]
      %v1147 = vld [vmem:[%s1 + $0x40] sm:$0xf]
      %v1148 = vld [vmem:[%s1 + $0x44] sm:$0xf]
      %v1149 = vld [vmem:[%s1 + $0x48] sm:$0xf]
      %v1150 = vld [vmem:[%s1 + $0x4c] sm:$0xf]
      %v1151 = vld [vmem:[%s1 + $0x50] sm:$0xf]
      %v1152 = vld [vmem:[%s1 + $0x54] sm:$0xf]
      %v1153 = vld [vmem:[%s1 + $0x58] sm:$0xf]
      %v1154 = vld [vmem:[%s1 + $0x5c] sm:$0xf]
      %v1155 = vld [vmem:[%s1 + $0x60] sm:$0xf]
      %v1156 = vld [vmem:[%s1 + $0x64] sm:$0xf]
      %v1157 = vld [vmem:[%s1 + $0x68] sm:$0xf]
      %v1158 = vld [vmem:[%s1 + $0x6c] sm:$0xf]
      %v1159 = vld [vmem:[%s1 + $0x70] sm:$0xf]
      %v1160 = vld [vmem:[%s1 + $0x74] sm:$0xf]
      %v1161 = vld [vmem:[%s1 + $0x78] sm:$0xf]
      %v1162 = vld [vmem:[%s1 + $0x7c] sm:$0xf]
      %v1163 = vld [vmem:[%s1 + $0x80] sm:$0xf]
      %v1164 = vld [vmem:[%s1 + $0x84] sm:$0xf]
      %v1165 = vld [vmem:[%s1 + $0x88] sm:$0xf]
      %v1166 = vld [vmem:[%s1 + $0x8c] sm:$0xf]
      %v1167 = vld [vmem:[%s1 + $0x90] sm:$0xf]
      %v1168 = vld [vmem:[%s1 + $0x94] sm:$0xf]
      %v1169 = vld [vmem:[%s1 + $0x98] sm:$0xf]
      %v1170 = vld [vmem:[%s1 + $0x9c] sm:$0xf]
      %v1171 = vld [vmem:[%s1 + $0xa0] sm:$0xf]
      %v1172 = vld [vmem:[%s1 + $0xa4] sm:$0xf]
      %v1173 = vld [vmem:[%s1 + $0xa8] sm:$0xf]
      %v1174 = vld [vmem:[%s1 + $0xac] sm:$0xf]
      %v1175 = vld [vmem:[%s1 + $0xb0] sm:$0xf]
      %v1176 = vld [vmem:[%s1 + $0xb4] sm:$0xf]
      %v1177 = vld [vmem:[%s1 + $0xb8] sm:$0xf]
      %v1178 = vld [vmem:[%s1 + $0xbc] sm:$0xf]
      %v1179 = vld [vmem:[%s1 + $0xc0] sm:$0xf]
      %v1180 = vld [vmem:[%s1 + $0xc4] sm:$0xf]
      %v1181 = vld [vmem:[%s1 + $0xc8] sm:$0xf]
      %v1182 = vld [vmem:[%s1 + $0xcc] sm:$0xf]
      %v1183 = vld [vmem:[%s1 + $0xd0] sm:$0xf]
      %v1184 = vld [vmem:[%s1 + $0xd4] sm:$0xf]
      %v1185 = vld [vmem:[%s1 + $0xd8] sm:$0xf]
      %v1186 = vld [vmem:[%s1 + $0xdc] sm:$0xf]
      %v1187 = vld [vmem:[%s1 + $0xe0] sm:$0xf]
      %v1188 = vld [vmem:[%s1 + $0xe4] sm:$0xf]
      %v1189 = vld [vmem:[%s1 + $0xe8] sm:$0xf]
      %v1190 = vld [vmem:[%s1 + $0xec] sm:$0xf]
      %v1191 = vld [vmem:[%s1 + $0xf0] sm:$0xf]
      %v1192 = vld [vmem:[%s1 + $0xf4] sm:$0xf]
      %v1193 = vld [vmem:[%s1 + $0xf8] sm:$0xf]
      %v1194 = vld [vmem:[%s1 + $0xfc] sm:$0xf]
      %v1195 = vld [vmem:[%s1 + $0x100] sm:$0xf]
      %v1196 = vld [vmem:[%s1 + $0x104] sm:$0xf]
      %v1197 = vld [vmem:[%s1 + $0x108] sm:$0xf]
      %v1198 = vld [vmem:[%s1 + $0x10c] sm:$0xf]
      %v1199 = vld [vmem:[%s1 + $0x110] sm:$0xf]
      %v1200 = vld [vmem:[%s1 + $0x114] sm:$0xf]
      %v1201 = vld [vmem:[%s1 + $0x118] sm:$0xf]
      %v1202 = vld [vmem:[%s1 + $0x11c] sm:$0xf]
      %v1203 = vld [vmem:[%s1 + $0x120] sm:$0xf]
      %v1204 = vld [vmem:[%s1 + $0x124] sm:$0xf]
      %v1205 = vld [vmem:[%s1 + $0x128] sm:$0xf]
      %v1206 = vld [vmem:[%s1 + $0x12c] sm:$0xf]
      %v1207 = vld [vmem:[%s1 + $0x130] sm:$0xf]
      %v1208 = vld [vmem:[%s1 + $0x134] sm:$0xf]
      %v1209 = vld [vmem:[%s1 + $0x138] sm:$0xf]
      %v1210 = vld [vmem:[%s1 + $0x13c] sm:$0xf]
      %v1211 = vld [vmem:[%s1 + $0x140] sm:$0xf]
      %v1212 = vld [vmem:[%s1 + $0x144] sm:$0xf]
      %v1213 = vld [vmem:[%s1 + $0x148] sm:$0xf]
      %v1214 = vld [vmem:[%s1 + $0x14c] sm:$0xf]
      %v1215 = vld [vmem:[%s1 + $0x150] sm:$0xf]
      %v1216 = vld [vmem:[%s1 + $0x154] sm:$0xf]
      %v1217 = vld [vmem:[%s1 + $0x158] sm:$0xf]
      %v1218 = vld [vmem:[%s1 + $0x15c] sm:$0xf]
      %v1219 = vld [vmem:[%s1 + $0x160] sm:$0xf]
      %v1220 = vld [vmem:[%s1 + $0x164] sm:$0xf]
      %v1221 = vld [vmem:[%s1 + $0x168] sm:$0xf]
      %v1222 = vld [vmem:[%s1 + $0x16c] sm:$0xf]
      %v1223 = vld [vmem:[%s1 + $0x170] sm:$0xf]
      %v1224 = vld [vmem:[%s1 + $0x174] sm:$0xf]
      %v1225 = vld [vmem:[%s1 + $0x178] sm:$0xf]
      %v1226 = vld [vmem:[%s1 + $0x17c] sm:$0xf]
      %v1227 = vld [vmem:[%s1 + $0x180] sm:$0xf]
      %v1228 = vld [vmem:[%s1 + $0x184] sm:$0xf]
      %v1229 = vld [vmem:[%s1 + $0x188] sm:$0xf]
      %v1230 = vld [vmem:[%s1 + $0x18c] sm:$0xf]
      %v1231 = vld [vmem:[%s1 + $0x190] sm:$0xf]
      %v1232 = vld [vmem:[%s1 + $0x194] sm:$0xf]
      %v1233 = vld [vmem:[%s1 + $0x198] sm:$0xf]
      %v1234 = vld [vmem:[%s1 + $0x19c] sm:$0xf]
      %v1235 = vld [vmem:[%s1 + $0x1a0] sm:$0xf]
      %v1236 = vld [vmem:[%s1 + $0x1a4] sm:$0xf]
      %v1237 = vld [vmem:[%s1 + $0x1a8] sm:$0xf]
      %v1238 = vld [vmem:[%s1 + $0x1ac] sm:$0xf]
      %v1239 = vld [vmem:[%s1 + $0x1b0] sm:$0xf]
      %v1240 = vld [vmem:[%s1 + $0x1b4] sm:$0xf]
      %v1241 = vld [vmem:[%s1 + $0x1b8] sm:$0xf]
      %v1242 = vld [vmem:[%s1 + $0x1bc] sm:$0xf]
      %v1243 = vld [vmem:[%s1 + $0x1c0] sm:$0xf]
      %v1244 = vld [vmem:[%s1 + $0x1c4] sm:$0xf]
      %v1245 = vld [vmem:[%s1 + $0x1c8] sm:$0xf]
      %v1246 = vld [vmem:[%s1 + $0x1cc] sm:$0xf]
      %v1247 = vld [vmem:[%s1 + $0x1d0] sm:$0xf]
      %v1248 = vld [vmem:[%s1 + $0x1d4] sm:$0xf]
      %v1249 = vld [vmem:[%s1 + $0x1d8] sm:$0xf]
      %v1250 = vld [vmem:[%s1 + $0x1dc] sm:$0xf]
      %v1251 = vld [vmem:[%s1 + $0x1e0] sm:$0xf]
      %v1252 = vld [vmem:[%s1 + $0x1e4] sm:$0xf]
      %v1253 = vld [vmem:[%s1 + $0x1e8] sm:$0xf]
      %v1254 = vld [vmem:[%s1 + $0x1ec] sm:$0xf]
      %v1255 = vld [vmem:[%s1 + $0x1f0] sm:$0xf]
      %v1256 = vld [vmem:[%s1 + $0x1f4] sm:$0xf]
      %v1257 = vld [vmem:[%s1 + $0x1f8] sm:$0xf]
      %v1258 = vld [vmem:[%s1 + $0x1fc] sm:$0xf]
      %v1259 = vld [vmem:[%s1 + $0x200] sm:$0xf]
      %v1260 = vld [vmem:[%s1 + $0x204] sm:$0xf]
      %v1261 = vld [vmem:[%s1 + $0x208] sm:$0xf]
      %v1262 = vld [vmem:[%s1 + $0x20c] sm:$0xf]
      %v1263 = vld [vmem:[%s1 + $0x210] sm:$0xf]
      %v1264 = vld [vmem:[%s1 + $0x214] sm:$0xf]
      %v1265 = vld [vmem:[%s1 + $0x218] sm:$0xf]
      %v1266 = vld [vmem:[%s1 + $0x21c] sm:$0xf]
      %v1267 = vld [vmem:[%s1 + $0x220] sm:$0xf]
      %v1268 = vld [vmem:[%s1 + $0x224] sm:$0xf]
      %v1269 = vld [vmem:[%s1 + $0x228] sm:$0xf]
      %v1270 = vld [vmem:[%s1 + $0x22c] sm:$0xf]
      %v1271 = vld [vmem:[%s1 + $0x230] sm:$0xf]
      %v1272 = vld [vmem:[%s1 + $0x234] sm:$0xf]
      %v1273 = vld [vmem:[%s1 + $0x238] sm:$0xf]
      %v1274 = vld [vmem:[%s1 + $0x23c] sm:$0xf]
      %v1275 = vld [vmem:[%s2] sm:$0x1]
      %v1277 = vlaneseq
      %v1278 = vshrl.u32 %v1277, 7
      %v1279 = vsub.s32 0, %v1278
      %v1280 = vrot.slane %v1275, %v1279
      %v1426 = vunpack.c.l.b16 %v1131
      %v1427 = vunpack.c.l.b16 %v1132
      %v1428 = vunpack.c.l.b16 %v1133
      %v1429 = vunpack.c.l.b16 %v1134
      %v1430 = vunpack.c.l.b16 %v1135
      %v1431 = vunpack.c.l.b16 %v1136
      %v1432 = vunpack.c.l.b16 %v1137
      %v1433 = vunpack.c.l.b16 %v1138
      %v1434 = vunpack.c.l.b16 %v1139
      %v1435 = vunpack.c.l.b16 %v1140
      %v1436 = vunpack.c.l.b16 %v1141
      %v1437 = vunpack.c.l.b16 %v1142
      %v1438 = vunpack.c.l.b16 %v1143
      %v1439 = vunpack.c.l.b16 %v1144
      %v1440 = vunpack.c.l.b16 %v1145
      %v1441 = vunpack.c.l.b16 %v1146
      %v1442 = vunpack.c.l.b16 %v1147
      %v1443 = vunpack.c.l.b16 %v1148
      %v1444 = vunpack.c.l.b16 %v1149
      %v1445 = vunpack.c.l.b16 %v1150
      %v1446 = vunpack.c.l.b16 %v1151
      %v1447 = vunpack.c.l.b16 %v1152
      %v1448 = vunpack.c.l.b16 %v1153
      %v1449 = vunpack.c.l.b16 %v1154
      %v1450 = vunpack.c.l.b16 %v1155
      %v1451 = vunpack.c.l.b16 %v1156
      %v1452 = vunpack.c.l.b16 %v1157
      %v1453 = vunpack.c.l.b16 %v1158
      %v1454 = vunpack.c.l.b16 %v1159
      %v1455 = vunpack.c.l.b16 %v1160
      %v1456 = vunpack.c.l.b16 %v1161
      %v1457 = vunpack.c.l.b16 %v1162
      %v1458 = vunpack.c.l.b16 %v1163
      %v1459 = vunpack.c.l.b16 %v1164
      %v1460 = vunpack.c.l.b16 %v1165
      %v1461 = vunpack.c.l.b16 %v1166
      %v1462 = vunpack.c.l.b16 %v1167
      %v1463 = vunpack.c.l.b16 %v1168
      %v1464 = vunpack.c.l.b16 %v1169
      %v1465 = vunpack.c.l.b16 %v1170
      %v1466 = vunpack.c.l.b16 %v1171
      %v1467 = vunpack.c.l.b16 %v1172
      %v1468 = vunpack.c.l.b16 %v1173
      %v1469 = vunpack.c.l.b16 %v1174
      %v1470 = vunpack.c.l.b16 %v1175
      %v1471 = vunpack.c.l.b16 %v1176
      %v1472 = vunpack.c.l.b16 %v1177
      %v1473 = vunpack.c.l.b16 %v1178
      %v1474 = vunpack.c.l.b16 %v1179
      %v1475 = vunpack.c.l.b16 %v1180
      %v1476 = vunpack.c.l.b16 %v1181
      %v1477 = vunpack.c.l.b16 %v1182
      %v1478 = vunpack.c.l.b16 %v1183
      %v1479 = vunpack.c.l.b16 %v1184
      %v1480 = vunpack.c.l.b16 %v1185
      %v1481 = vunpack.c.l.b16 %v1186
      %v1482 = vunpack.c.l.b16 %v1187
      %v1483 = vunpack.c.l.b16 %v1188
      %v1484 = vunpack.c.l.b16 %v1189
      %v1485 = vunpack.c.l.b16 %v1190
      %v1486 = vunpack.c.l.b16 %v1191
      %v1487 = vunpack.c.l.b16 %v1192
      %v1488 = vunpack.c.l.b16 %v1193
      %v1489 = vunpack.c.l.b16 %v1194
      %v1490 = vunpack.c.l.b16 %v1195
      %v1491 = vunpack.c.l.b16 %v1196
      %v1492 = vunpack.c.l.b16 %v1197
      %v1493 = vunpack.c.l.b16 %v1198
      %v1494 = vunpack.c.l.b16 %v1199
      %v1495 = vunpack.c.l.b16 %v1200
      %v1496 = vunpack.c.l.b16 %v1201
      %v1497 = vunpack.c.l.b16 %v1202
      %v1498 = vunpack.c.l.b16 %v1203
      %v1499 = vunpack.c.l.b16 %v1204
      %v1500 = vunpack.c.l.b16 %v1205
      %v1501 = vunpack.c.l.b16 %v1206
      %v1502 = vunpack.c.l.b16 %v1207
      %v1503 = vunpack.c.l.b16 %v1208
      %v1504 = vunpack.c.l.b16 %v1209
      %v1505 = vunpack.c.l.b16 %v1210
      %v1506 = vunpack.c.l.b16 %v1211
      %v1507 = vunpack.c.l.b16 %v1212
      %v1508 = vunpack.c.l.b16 %v1213
      %v1509 = vunpack.c.l.b16 %v1214
      %v1510 = vunpack.c.l.b16 %v1215
      %v1511 = vunpack.c.l.b16 %v1216
      %v1512 = vunpack.c.l.b16 %v1217
      %v1513 = vunpack.c.l.b16 %v1218
      %v1514 = vunpack.c.l.b16 %v1219
      %v1515 = vunpack.c.l.b16 %v1220
      %v1516 = vunpack.c.l.b16 %v1221
      %v1517 = vunpack.c.l.b16 %v1222
      %v1518 = vunpack.c.l.b16 %v1223
      %v1519 = vunpack.c.l.b16 %v1224
      %v1520 = vunpack.c.l.b16 %v1225
      %v1521 = vunpack.c.l.b16 %v1226
      %v1522 = vunpack.c.l.b16 %v1227
      %v1523 = vunpack.c.l.b16 %v1228
      %v1524 = vunpack.c.l.b16 %v1229
      %v1525 = vunpack.c.l.b16 %v1230
      %v1526 = vunpack.c.l.b16 %v1231
      %v1527 = vunpack.c.l.b16 %v1232
      %v1528 = vunpack.c.l.b16 %v1233
      %v1529 = vunpack.c.l.b16 %v1234
      %v1530 = vunpack.c.l.b16 %v1235
      %v1531 = vunpack.c.l.b16 %v1236
      %v1532 = vunpack.c.l.b16 %v1237
      %v1533 = vunpack.c.l.b16 %v1238
      %v1534 = vunpack.c.l.b16 %v1239
      %v1535 = vunpack.c.l.b16 %v1240
      %v1536 = vunpack.c.l.b16 %v1241
      %v1537 = vunpack.c.l.b16 %v1242
      %v1538 = vunpack.c.l.b16 %v1243
      %v1539 = vunpack.c.l.b16 %v1244
      %v1540 = vunpack.c.l.b16 %v1245
      %v1541 = vunpack.c.l.b16 %v1246
      %v1542 = vunpack.c.l.b16 %v1247
      %v1543 = vunpack.c.l.b16 %v1248
      %v1544 = vunpack.c.l.b16 %v1249
      %v1545 = vunpack.c.l.b16 %v1250
      %v1546 = vunpack.c.l.b16 %v1251
      %v1547 = vunpack.c.l.b16 %v1252
      %v1548 = vunpack.c.l.b16 %v1253
      %v1549 = vunpack.c.l.b16 %v1254
      %v1550 = vunpack.c.l.b16 %v1255
      %v1551 = vunpack.c.l.b16 %v1256
      %v1552 = vunpack.c.l.b16 %v1257
      %v1553 = vunpack.c.l.b16 %v1258
      %v1554 = vunpack.c.l.b16 %v1259
      %v1555 = vunpack.c.l.b16 %v1260
      %v1556 = vunpack.c.l.b16 %v1261
      %v1557 = vunpack.c.l.b16 %v1262
      %v1558 = vunpack.c.l.b16 %v1263
      %v1559 = vunpack.c.l.b16 %v1264
      %v1560 = vunpack.c.l.b16 %v1265
      %v1561 = vunpack.c.l.b16 %v1266
      %v1562 = vunpack.c.l.b16 %v1267
      %v1563 = vunpack.c.l.b16 %v1268
      %v1564 = vunpack.c.l.b16 %v1269
      %v1565 = vunpack.c.l.b16 %v1270
      %v1566 = vunpack.c.l.b16 %v1271
      %v1567 = vunpack.c.l.b16 %v1272
      %v1568 = vunpack.c.l.b16 %v1273
      %v1569 = vunpack.c.l.b16 %v1274
      %v1570 = vpack.c.b16 %v1427, %v1426
      %v1571 = vpack.c.b16 %v1429, %v1428
      %v1572 = vpack.c.b16 %v1431, %v1430
      %v1573 = vpack.c.b16 %v1433, %v1432
      %v1574 = vpack.c.b16 %v1435, %v1434
      %v1575 = vpack.c.b16 %v1437, %v1436
      %v1576 = vpack.c.b16 %v1439, %v1438
      %v1577 = vpack.c.b16 %v1441, %v1440
      %v1578 = vpack.c.b16 %v1443, %v1442
      %v1579 = vpack.c.b16 %v1445, %v1444
      %v1580 = vpack.c.b16 %v1447, %v1446
      %v1581 = vpack.c.b16 %v1449, %v1448
      %v1582 = vpack.c.b16 %v1451, %v1450
      %v1583 = vpack.c.b16 %v1453, %v1452
      %v1584 = vpack.c.b16 %v1455, %v1454
      %v1585 = vpack.c.b16 %v1457, %v1456
      %v1586 = vpack.c.b16 %v1459, %v1458
      %v1587 = vpack.c.b16 %v1461, %v1460
      %v1588 = vpack.c.b16 %v1463, %v1462
      %v1589 = vpack.c.b16 %v1465, %v1464
      %v1590 = vpack.c.b16 %v1467, %v1466
      %v1591 = vpack.c.b16 %v1469, %v1468
      %v1592 = vpack.c.b16 %v1471, %v1470
      %v1593 = vpack.c.b16 %v1473, %v1472
      %v1594 = vpack.c.b16 %v1475, %v1474
      %v1595 = vpack.c.b16 %v1477, %v1476
      %v1596 = vpack.c.b16 %v1479, %v1478
      %v1597 = vpack.c.b16 %v1481, %v1480
      %v1598 = vpack.c.b16 %v1483, %v1482
      %v1599 = vpack.c.b16 %v1485, %v1484
      %v1600 = vpack.c.b16 %v1487, %v1486
      %v1601 = vpack.c.b16 %v1489, %v1488
      %v1602 = vpack.c.b16 %v1491, %v1490
      %v1603 = vpack.c.b16 %v1493, %v1492
      %v1604 = vpack.c.b16 %v1495, %v1494
      %v1605 = vpack.c.b16 %v1497, %v1496
      %v1606 = vpack.c.b16 %v1499, %v1498
      %v1607 = vpack.c.b16 %v1501, %v1500
      %v1608 = vpack.c.b16 %v1503, %v1502
      %v1609 = vpack.c.b16 %v1505, %v1504
      %v1610 = vpack.c.b16 %v1507, %v1506
      %v1611 = vpack.c.b16 %v1509, %v1508
      %v1612 = vpack.c.b16 %v1511, %v1510
      %v1613 = vpack.c.b16 %v1513, %v1512
      %v1614 = vpack.c.b16 %v1515, %v1514
      %v1615 = vpack.c.b16 %v1517, %v1516
      %v1616 = vpack.c.b16 %v1519, %v1518
      %v1617 = vpack.c.b16 %v1521, %v1520
      %v1618 = vpack.c.b16 %v1523, %v1522
      %v1619 = vpack.c.b16 %v1525, %v1524
      %v1620 = vpack.c.b16 %v1527, %v1526
      %v1621 = vpack.c.b16 %v1529, %v1528
      %v1622 = vpack.c.b16 %v1531, %v1530
      %v1623 = vpack.c.b16 %v1533, %v1532
      %v1624 = vpack.c.b16 %v1535, %v1534
      %v1625 = vpack.c.b16 %v1537, %v1536
      %v1626 = vpack.c.b16 %v1539, %v1538
      %v1627 = vpack.c.b16 %v1541, %v1540
      %v1628 = vpack.c.b16 %v1543, %v1542
      %v1629 = vpack.c.b16 %v1545, %v1544
      %v1630 = vpack.c.b16 %v1547, %v1546
      %v1631 = vpack.c.b16 %v1549, %v1548
      %v1632 = vpack.c.b16 %v1551, %v1550
      %v1633 = vpack.c.b16 %v1553, %v1552
      %v1634 = vpack.c.b16 %v1555, %v1554
      %v1635 = vpack.c.b16 %v1557, %v1556
      %v1636 = vpack.c.b16 %v1559, %v1558
      %v1637 = vpack.c.b16 %v1561, %v1560
      %v1638 = vpack.c.b16 %v1563, %v1562
      %v1639 = vpack.c.b16 %v1565, %v1564
      %v1640 = vpack.c.b16 %v1567, %v1566
      %v1641 = vpack.c.b16 %v1569, %v1568
      %1714 = vmatprep.subr.bf16.mxu0 0
      %1715 = vmatpush1.bf16.msra.mxu0 %v1577
      %1716 = vmatprep.subr.bf16.mxu0 0
      %1717 = vmatpush1.bf16.msra.mxu0 %v1576
      %1718 = vmatprep.subr.bf16.mxu0 0
      %1719 = vmatpush1.bf16.msra.mxu0 %v1575
      %1720 = vmatprep.subr.bf16.mxu0 0
      %1721 = vmatpush1.bf16.msra.mxu0 %v1574
      %1722 = vmatprep.subr.bf16.mxu0 0
      %1723 = vmatpush1.bf16.msra.mxu0 %v1573
      %1724 = vmatprep.subr.bf16.mxu0 0
      %1725 = vmatpush1.bf16.msra.mxu0 %v1572
      %1726 = vmatprep.subr.bf16.mxu0 0
      %1727 = vmatpush1.bf16.msra.mxu0 %v1571
      %1728 = vmatprep.subr.bf16.mxu0 0
      %1729 = vmatpush1.bf16.msra.mxu0 %v1570
      %1730 = vmatprep.subr.bf16.mxu0 0
      %1731 = vmatpush2.bf16.msra.mxu0 %v1585
      %1732 = vmatprep.subr.bf16.mxu0 0
      %1733 = vmatpush2.bf16.msra.mxu0 %v1584
      %1734 = vmatprep.subr.bf16.mxu0 0
      %1735 = vmatpush2.bf16.msra.mxu0 %v1583
      %1736 = vmatprep.subr.bf16.mxu0 0
      %1737 = vmatpush2.bf16.msra.mxu0 %v1582
      %1738 = vmatprep.subr.bf16.mxu0 0
      %1739 = vmatpush2.bf16.msra.mxu0 %v1581
      %1740 = vmatprep.subr.bf16.mxu0 0
      %1741 = vmatpush2.bf16.msra.mxu0 %v1580
      %1742 = vmatprep.subr.bf16.mxu0 0
      %1743 = vmatpush2.bf16.msra.mxu0 %v1579
      %1744 = vmatprep.subr.bf16.mxu0 0
      %1745 = vmatpush2.bf16.msra.mxu0 %v1578
      %1746 = vmatprep.mubr.bf16.mxu0 %v1011
      %1747 = vmatmul.mubr.bf16.gmra.mxu0 %v947
      %v1748 = vpop.f32.mrf.mxu0
      %v1749 = vadd.f32 %v1280, %v1748
      %v1750 = vpop.f32.mrf.mxu0
      %v1751 = vpop.f32.mrf.mxu0
      %v1752 = vadd.f32 %v1280, %v1751
      %v1753 = vpop.f32.mrf.mxu0
      %1754 = vmatprep.mubr.bf16.mxu0 %v1012
      %1755 = vmatmul.mubr.bf16.gmra.mxu0 %v948
      %v1756 = vpop.f32.mrf.mxu0
      %v1757 = vadd.f32 %v1280, %v1756
      %v1758 = vpop.f32.mrf.mxu0
      %v1759 = vpop.f32.mrf.mxu0
      %v1760 = vadd.f32 %v1280, %v1759
      %v1761 = vpop.f32.mrf.mxu0
      %1762 = vmatprep.mubr.bf16.mxu0 %v1013
      %1763 = vmatmul.mubr.bf16.gmra.mxu0 %v949
      %v1764 = vpop.f32.mrf.mxu0
      %v1765 = vadd.f32 %v1280, %v1764
      %v1766 = vpop.f32.mrf.mxu0
      %v1767 = vpop.f32.mrf.mxu0
      %v1768 = vadd.f32 %v1280, %v1767
      %v1769 = vpop.f32.mrf.mxu0
      %1770 = vmatprep.mubr.bf16.mxu0 %v1014
      %1771 = vmatmul.mubr.bf16.gmra.mxu0 %v950
      %v1772 = vpop.f32.mrf.mxu0
      %v1773 = vadd.f32 %v1280, %v1772
      %v1774 = vpop.f32.mrf.mxu0
      %v1775 = vpop.f32.mrf.mxu0
      %v1776 = vadd.f32 %v1280, %v1775
      %v1777 = vpop.f32.mrf.mxu0
      %1778 = vmatprep.mubr.bf16.mxu0 %v1015
      %1779 = vmatmul.mubr.bf16.gmra.mxu0 %v951
      %v1780 = vpop.f32.mrf.mxu0
      %v1781 = vadd.f32 %v1280, %v1780
      %v1782 = vpop.f32.mrf.mxu0
      %v1783 = vpop.f32.mrf.mxu0
      %v1784 = vadd.f32 %v1280, %v1783
      %v1785 = vpop.f32.mrf.mxu0
      %1786 = vmatprep.mubr.bf16.mxu0 %v1016
      %1787 = vmatmul.mubr.bf16.gmra.mxu0 %v952
      %v1788 = vpop.f32.mrf.mxu0
      %v1789 = vadd.f32 %v1280, %v1788
      %v1790 = vpop.f32.mrf.mxu0
      %v1791 = vpop.f32.mrf.mxu0
      %v1792 = vadd.f32 %v1280, %v1791
      %v1793 = vpop.f32.mrf.mxu0
      %1794 = vmatprep.mubr.bf16.mxu0 %v1017
      %1795 = vmatmul.mubr.bf16.gmra.mxu0 %v953
      %v1796 = vpop.f32.mrf.mxu0
      %v1797 = vadd.f32 %v1280, %v1796
      %v1798 = vpop.f32.mrf.mxu0
      %v1799 = vpop.f32.mrf.mxu0
      %v1800 = vadd.f32 %v1280, %v1799
      %v1801 = vpop.f32.mrf.mxu0
      %1802 = vmatprep.mubr.bf16.mxu0 %v1018
      %1803 = vmatmul.mubr.bf16.gmra.mxu0 %v954
      %v1804 = vpop.f32.mrf.mxu0
      %v1805 = vadd.f32 %v1280, %v1804
      %v1806 = vpop.f32.mrf.mxu0
      %v1807 = vpop.f32.mrf.mxu0
      %v1808 = vadd.f32 %v1280, %v1807
      %v1809 = vpop.f32.mrf.mxu0
      %1810 = vmatprep.mubr.bf16.mxu0 %v1019
      %1811 = vmatmul.mubr.bf16.gmra.mxu0 %v955
      %v1812 = vpop.f32.mrf.mxu0
      %v1813 = vadd.f32 %v1280, %v1812
      %v1814 = vpop.f32.mrf.mxu0
      %v1815 = vpop.f32.mrf.mxu0
      %v1816 = vadd.f32 %v1280, %v1815
      %v1817 = vpop.f32.mrf.mxu0
      %1818 = vmatprep.mubr.bf16.mxu0 %v1020
      %1819 = vmatmul.mubr.bf16.gmra.mxu0 %v956
      %v1820 = vpop.f32.mrf.mxu0
      %v1821 = vadd.f32 %v1280, %v1820
      %v1822 = vpop.f32.mrf.mxu0
      %v1823 = vpop.f32.mrf.mxu0
      %v1824 = vadd.f32 %v1280, %v1823
      %v1825 = vpop.f32.mrf.mxu0
      %1826 = vmatprep.mubr.bf16.mxu0 %v1021
      %1827 = vmatmul.mubr.bf16.gmra.mxu0 %v957
      %v1828 = vpop.f32.mrf.mxu0
      %v1829 = vadd.f32 %v1280, %v1828
      %v1830 = vpop.f32.mrf.mxu0
      %v1831 = vpop.f32.mrf.mxu0
      %v1832 = vadd.f32 %v1280, %v1831
      %v1833 = vpop.f32.mrf.mxu0
      %1834 = vmatprep.mubr.bf16.mxu0 %v1022
      %1835 = vmatmul.mubr.bf16.gmra.mxu0 %v958
      %v1836 = vpop.f32.mrf.mxu0
      %v1837 = vadd.f32 %v1280, %v1836
      %v1838 = vpop.f32.mrf.mxu0
      %v1839 = vpop.f32.mrf.mxu0
      %v1840 = vadd.f32 %v1280, %v1839
      %v1841 = vpop.f32.mrf.mxu0
      %1842 = vmatprep.mubr.bf16.mxu0 %v1023
      %1843 = vmatmul.mubr.bf16.gmra.mxu0 %v959
      %v1844 = vpop.f32.mrf.mxu0
      %v1845 = vadd.f32 %v1280, %v1844
      %v1846 = vpop.f32.mrf.mxu0
      %v1847 = vpop.f32.mrf.mxu0
      %v1848 = vadd.f32 %v1280, %v1847
      %v1849 = vpop.f32.mrf.mxu0
      %1850 = vmatprep.mubr.bf16.mxu0 %v1024
      %1851 = vmatmul.mubr.bf16.gmra.mxu0 %v960
      %v1852 = vpop.f32.mrf.mxu0
      %v1853 = vadd.f32 %v1280, %v1852
      %v1854 = vpop.f32.mrf.mxu0
      %v1855 = vpop.f32.mrf.mxu0
      %v1856 = vadd.f32 %v1280, %v1855
      %v1857 = vpop.f32.mrf.mxu0
      %1858 = vmatprep.mubr.bf16.mxu0 %v1025
      %1859 = vmatmul.mubr.bf16.gmra.mxu0 %v961
      %v1860 = vpop.f32.mrf.mxu0
      %v1861 = vadd.f32 %v1280, %v1860
      %v1862 = vpop.f32.mrf.mxu0
      %v1863 = vpop.f32.mrf.mxu0
      %v1864 = vadd.f32 %v1280, %v1863
      %v1865 = vpop.f32.mrf.mxu0
      %1866 = vmatprep.mubr.bf16.mxu0 %v1026
      %1867 = vmatmul.mubr.bf16.gmra.mxu0 %v962
      %v1868 = vpop.f32.mrf.mxu0
      %v1869 = vadd.f32 %v1280, %v1868
      %v1870 = vpop.f32.mrf.mxu0
      %v1871 = vpop.f32.mrf.mxu0
      %v1872 = vadd.f32 %v1280, %v1871
      %v1873 = vpop.f32.mrf.mxu0
      %1874 = vdwg.mxu0
      %1875 = vmatprep.subr.bf16.mxu0 0
      %1876 = vmatpush1.bf16.msra.mxu0 %v1593
      %1877 = vmatprep.subr.bf16.mxu0 0
      %1878 = vmatpush1.bf16.msra.mxu0 %v1592
      %1879 = vmatprep.subr.bf16.mxu0 0
      %1880 = vmatpush1.bf16.msra.mxu0 %v1591
      %1881 = vmatprep.subr.bf16.mxu0 0
      %1882 = vmatpush1.bf16.msra.mxu0 %v1590
      %1883 = vmatprep.subr.bf16.mxu0 0
      %1884 = vmatpush1.bf16.msra.mxu0 %v1589
      %1885 = vmatprep.subr.bf16.mxu0 0
      %1886 = vmatpush1.bf16.msra.mxu0 %v1588
      %1887 = vmatprep.subr.bf16.mxu0 0
      %1888 = vmatpush1.bf16.msra.mxu0 %v1587
      %1889 = vmatprep.subr.bf16.mxu0 0
      %1890 = vmatpush1.bf16.msra.mxu0 %v1586
      %1891 = vmatprep.subr.bf16.mxu0 0
      %1892 = vmatpush2.bf16.msra.mxu0 %v1601
      %1893 = vmatprep.subr.bf16.mxu0 0
      %1894 = vmatpush2.bf16.msra.mxu0 %v1600
      %1895 = vmatprep.subr.bf16.mxu0 0
      %1896 = vmatpush2.bf16.msra.mxu0 %v1599
      %1897 = vmatprep.subr.bf16.mxu0 0
      %1898 = vmatpush2.bf16.msra.mxu0 %v1598
      %1899 = vmatprep.subr.bf16.mxu0 0
      %1900 = vmatpush2.bf16.msra.mxu0 %v1597
      %1901 = vmatprep.subr.bf16.mxu0 0
      %1902 = vmatpush2.bf16.msra.mxu0 %v1596
      %1903 = vmatprep.subr.bf16.mxu0 0
      %1904 = vmatpush2.bf16.msra.mxu0 %v1595
      %1905 = vmatprep.subr.bf16.mxu0 0
      %1906 = vmatpush2.bf16.msra.mxu0 %v1594
      %1907 = vmatprep.mubr.bf16.mxu0 %v948
      %1908 = vmatmul.mubr.bf16.gmra.mxu0 %v1075
      %v1909 = vpop.f32.mrf.mxu0
      %v1910 = vadd.f32 %v1749, %v1909
      %v1911 = vpop.f32.mrf.mxu0
      %v1912 = vpop.f32.mrf.mxu0
      %v1913 = vadd.f32 %v1752, %v1912
      %v1914 = vpop.f32.mrf.mxu0
      %1915 = vmatprep.mubr.bf16.mxu0 %v949
      %1916 = vmatmul.mubr.bf16.gmra.mxu0 %v1076
      %v1917 = vpop.f32.mrf.mxu0
      %v1918 = vadd.f32 %v1757, %v1917
      %v1919 = vpop.f32.mrf.mxu0
      %v1920 = vpop.f32.mrf.mxu0
      %v1921 = vadd.f32 %v1760, %v1920
      %v1922 = vpop.f32.mrf.mxu0
      %1923 = vmatprep.mubr.bf16.mxu0 %v950
      %1924 = vmatmul.mubr.bf16.gmra.mxu0 %v1077
      %v1925 = vpop.f32.mrf.mxu0
      %v1926 = vadd.f32 %v1765, %v1925
      %v1927 = vpop.f32.mrf.mxu0
      %v1928 = vpop.f32.mrf.mxu0
      %v1929 = vadd.f32 %v1768, %v1928
      %v1930 = vpop.f32.mrf.mxu0
      %1931 = vmatprep.mubr.bf16.mxu0 %v951
      %1932 = vmatmul.mubr.bf16.gmra.mxu0 %v1078
      %v1933 = vpop.f32.mrf.mxu0
      %v1934 = vadd.f32 %v1773, %v1933
      %v1935 = vpop.f32.mrf.mxu0
      %v1936 = vpop.f32.mrf.mxu0
      %v1937 = vadd.f32 %v1776, %v1936
      %v1938 = vpop.f32.mrf.mxu0
      %1939 = vmatprep.mubr.bf16.mxu0 %v952
      %1940 = vmatmul.mubr.bf16.gmra.mxu0 %v1079
      %v1941 = vpop.f32.mrf.mxu0
      %v1942 = vadd.f32 %v1781, %v1941
      %v1943 = vpop.f32.mrf.mxu0
      %v1944 = vpop.f32.mrf.mxu0
      %v1945 = vadd.f32 %v1784, %v1944
      %v1946 = vpop.f32.mrf.mxu0
      %1947 = vmatprep.mubr.bf16.mxu0 %v953
      %1948 = vmatmul.mubr.bf16.gmra.mxu0 %v1080
      %v1949 = vpop.f32.mrf.mxu0
      %v1950 = vadd.f32 %v1789, %v1949
      %v1951 = vpop.f32.mrf.mxu0
      %v1952 = vpop.f32.mrf.mxu0
      %v1953 = vadd.f32 %v1792, %v1952
      %v1954 = vpop.f32.mrf.mxu0
      %1955 = vmatprep.mubr.bf16.mxu0 %v954
      %1956 = vmatmul.mubr.bf16.gmra.mxu0 %v1081
      %v1957 = vpop.f32.mrf.mxu0
      %v1958 = vadd.f32 %v1797, %v1957
      %v1959 = vpop.f32.mrf.mxu0
      %v1960 = vpop.f32.mrf.mxu0
      %v1961 = vadd.f32 %v1800, %v1960
      %v1962 = vpop.f32.mrf.mxu0
      %1963 = vmatprep.mubr.bf16.mxu0 %v955
      %1964 = vmatmul.mubr.bf16.gmra.mxu0 %v1082
      %v1965 = vpop.f32.mrf.mxu0
      %v1966 = vadd.f32 %v1805, %v1965
      %v1967 = vpop.f32.mrf.mxu0
      %v1968 = vpop.f32.mrf.mxu0
      %v1969 = vadd.f32 %v1808, %v1968
      %v1970 = vpop.f32.mrf.mxu0
      %1971 = vmatprep.mubr.bf16.mxu0 %v956
      %1972 = vmatmul.mubr.bf16.gmra.mxu0 %v1083
      %v1973 = vpop.f32.mrf.mxu0
      %v1974 = vadd.f32 %v1813, %v1973
      %v1975 = vpop.f32.mrf.mxu0
      %v1976 = vpop.f32.mrf.mxu0
      %v1977 = vadd.f32 %v1816, %v1976
      %v1978 = vpop.f32.mrf.mxu0
      %1979 = vmatprep.mubr.bf16.mxu0 %v957
      %1980 = vmatmul.mubr.bf16.gmra.mxu0 %v1084
      %v1981 = vpop.f32.mrf.mxu0
      %v1982 = vadd.f32 %v1821, %v1981
      %v1983 = vpop.f32.mrf.mxu0
      %v1984 = vpop.f32.mrf.mxu0
      %v1985 = vadd.f32 %v1824, %v1984
      %v1986 = vpop.f32.mrf.mxu0
      %1987 = vmatprep.mubr.bf16.mxu0 %v958
      %1988 = vmatmul.mubr.bf16.gmra.mxu0 %v1085
      %v1989 = vpop.f32.mrf.mxu0
      %v1990 = vadd.f32 %v1829, %v1989
      %v1991 = vpop.f32.mrf.mxu0
      %v1992 = vpop.f32.mrf.mxu0
      %v1993 = vadd.f32 %v1832, %v1992
      %v1994 = vpop.f32.mrf.mxu0
      %1995 = vmatprep.mubr.bf16.mxu0 %v959
      %1996 = vmatmul.mubr.bf16.gmra.mxu0 %v1086
      %v1997 = vpop.f32.mrf.mxu0
      %v1998 = vadd.f32 %v1837, %v1997
      %v1999 = vpop.f32.mrf.mxu0
      %v2000 = vpop.f32.mrf.mxu0
      %v2001 = vadd.f32 %v1840, %v2000
      %v2002 = vpop.f32.mrf.mxu0
      %2003 = vmatprep.mubr.bf16.mxu0 %v960
      %2004 = vmatmul.mubr.bf16.gmra.mxu0 %v1087
      %v2005 = vpop.f32.mrf.mxu0
      %v2006 = vadd.f32 %v1845, %v2005
      %v2007 = vpop.f32.mrf.mxu0
      %v2008 = vpop.f32.mrf.mxu0
      %v2009 = vadd.f32 %v1848, %v2008
      %v2010 = vpop.f32.mrf.mxu0
      %2011 = vmatprep.mubr.bf16.mxu0 %v961
      %2012 = vmatmul.mubr.bf16.gmra.mxu0 %v1088
      %v2013 = vpop.f32.mrf.mxu0
      %v2014 = vadd.f32 %v1853, %v2013
      %v2015 = vpop.f32.mrf.mxu0
      %v2016 = vpop.f32.mrf.mxu0
      %v2017 = vadd.f32 %v1856, %v2016
      %v2018 = vpop.f32.mrf.mxu0
      %2019 = vmatprep.mubr.bf16.mxu0 %v962
      %2020 = vmatmul.mubr.bf16.gmra.mxu0 %v1089
      %v2021 = vpop.f32.mrf.mxu0
      %v2022 = vadd.f32 %v1861, %v2021
      %v2023 = vpop.f32.mrf.mxu0
      %v2024 = vpop.f32.mrf.mxu0
      %v2025 = vadd.f32 %v1864, %v2024
      %v2026 = vpop.f32.mrf.mxu0
      %2027 = vmatprep.mubr.bf16.mxu0 %v1109
      %2028 = vmatmul.mubr.bf16.gmra.mxu0 %v1090
      %v2029 = vpop.f32.mrf.mxu0
      %v2030 = vadd.f32 %v1869, %v2029
      %v2031 = vpop.f32.mrf.mxu0
      %v2032 = vpop.f32.mrf.mxu0
      %v2033 = vadd.f32 %v1872, %v2032
      %v2034 = vpop.f32.mrf.mxu0
      %2035 = vdwg.mxu0
      %2036 = vmatprep.subr.bf16.mxu0 0
      %2037 = vmatpush1.bf16.msra.mxu0 %v1609
      %2038 = vmatprep.subr.bf16.mxu0 0
      %2039 = vmatpush1.bf16.msra.mxu0 %v1608
      %2040 = vmatprep.subr.bf16.mxu0 0
      %2041 = vmatpush1.bf16.msra.mxu0 %v1607
      %2042 = vmatprep.subr.bf16.mxu0 0
      %2043 = vmatpush1.bf16.msra.mxu0 %v1606
      %2044 = vmatprep.subr.bf16.mxu0 0
      %2045 = vmatpush1.bf16.msra.mxu0 %v1605
      %2046 = vmatprep.subr.bf16.mxu0 0
      %2047 = vmatpush1.bf16.msra.mxu0 %v1604
      %2048 = vmatprep.subr.bf16.mxu0 0
      %2049 = vmatpush1.bf16.msra.mxu0 %v1603
      %2050 = vmatprep.subr.bf16.mxu0 0
      %2051 = vmatpush1.bf16.msra.mxu0 %v1602
      %2052 = vmatprep.subr.bf16.mxu0 0
      %2053 = vmatpush2.bf16.msra.mxu0 %v1617
      %2054 = vmatprep.subr.bf16.mxu0 0
      %2055 = vmatpush2.bf16.msra.mxu0 %v1616
      %2056 = vmatprep.subr.bf16.mxu0 0
      %2057 = vmatpush2.bf16.msra.mxu0 %v1615
      %2058 = vmatprep.subr.bf16.mxu0 0
      %2059 = vmatpush2.bf16.msra.mxu0 %v1614
      %2060 = vmatprep.subr.bf16.mxu0 0
      %2061 = vmatpush2.bf16.msra.mxu0 %v1613
      %2062 = vmatprep.subr.bf16.mxu0 0
      %2063 = vmatpush2.bf16.msra.mxu0 %v1612
      %2064 = vmatprep.subr.bf16.mxu0 0
      %2065 = vmatpush2.bf16.msra.mxu0 %v1611
      %2066 = vmatprep.subr.bf16.mxu0 0
      %2067 = vmatpush2.bf16.msra.mxu0 %v1610
      %2068 = vmatprep.mubr.bf16.mxu0 %v1076
      %2069 = vmatmul.mubr.bf16.gmra.mxu0 %v1012
      %v2070 = vpop.f32.mrf.mxu0
      %v2071 = vadd.f32 %v1910, %v2070
      %v2072 = vpop.f32.mrf.mxu0
      %v2073 = vpop.f32.mrf.mxu0
      %v2074 = vadd.f32 %v1913, %v2073
      %v2075 = vpop.f32.mrf.mxu0
      %2076 = vmatprep.mubr.bf16.mxu0 %v1077
      %2077 = vmatmul.mubr.bf16.gmra.mxu0 %v1013
      %v2078 = vpop.f32.mrf.mxu0
      %v2079 = vadd.f32 %v1918, %v2078
      %v2080 = vpop.f32.mrf.mxu0
      %v2081 = vpop.f32.mrf.mxu0
      %v2082 = vadd.f32 %v1921, %v2081
      %v2083 = vpop.f32.mrf.mxu0
      %2084 = vmatprep.mubr.bf16.mxu0 %v1078
      %2085 = vmatmul.mubr.bf16.gmra.mxu0 %v1014
      %v2086 = vpop.f32.mrf.mxu0
      %v2087 = vadd.f32 %v1926, %v2086
      %v2088 = vpop.f32.mrf.mxu0
      %v2089 = vpop.f32.mrf.mxu0
      %v2090 = vadd.f32 %v1929, %v2089
      %v2091 = vpop.f32.mrf.mxu0
      %2092 = vmatprep.mubr.bf16.mxu0 %v1079
      %2093 = vmatmul.mubr.bf16.gmra.mxu0 %v1015
      %v2094 = vpop.f32.mrf.mxu0
      %v2095 = vadd.f32 %v1934, %v2094
      %v2096 = vpop.f32.mrf.mxu0
      %v2097 = vpop.f32.mrf.mxu0
      %v2098 = vadd.f32 %v1937, %v2097
      %v2099 = vpop.f32.mrf.mxu0
      %2100 = vmatprep.mubr.bf16.mxu0 %v1080
      %2101 = vmatmul.mubr.bf16.gmra.mxu0 %v1016
      %v2102 = vpop.f32.mrf.mxu0
      %v2103 = vadd.f32 %v1942, %v2102
      %v2104 = vpop.f32.mrf.mxu0
      %v2105 = vpop.f32.mrf.mxu0
      %v2106 = vadd.f32 %v1945, %v2105
      %v2107 = vpop.f32.mrf.mxu0
      %2108 = vmatprep.mubr.bf16.mxu0 %v1081
      %2109 = vmatmul.mubr.bf16.gmra.mxu0 %v1017
      %v2110 = vpop.f32.mrf.mxu0
      %v2111 = vadd.f32 %v1950, %v2110
      %v2112 = vpop.f32.mrf.mxu0
      %v2113 = vpop.f32.mrf.mxu0
      %v2114 = vadd.f32 %v1953, %v2113
      %v2115 = vpop.f32.mrf.mxu0
      %2116 = vmatprep.mubr.bf16.mxu0 %v1082
      %2117 = vmatmul.mubr.bf16.gmra.mxu0 %v1018
      %v2118 = vpop.f32.mrf.mxu0
      %v2119 = vadd.f32 %v1958, %v2118
      %v2120 = vpop.f32.mrf.mxu0
      %v2121 = vpop.f32.mrf.mxu0
      %v2122 = vadd.f32 %v1961, %v2121
      %v2123 = vpop.f32.mrf.mxu0
      %2124 = vmatprep.mubr.bf16.mxu0 %v1083
      %2125 = vmatmul.mubr.bf16.gmra.mxu0 %v1019
      %v2126 = vpop.f32.mrf.mxu0
      %v2127 = vadd.f32 %v1966, %v2126
      %v2128 = vpop.f32.mrf.mxu0
      %v2129 = vpop.f32.mrf.mxu0
      %v2130 = vadd.f32 %v1969, %v2129
      %v2131 = vpop.f32.mrf.mxu0
      %2132 = vmatprep.mubr.bf16.mxu0 %v1084
      %2133 = vmatmul.mubr.bf16.gmra.mxu0 %v1020
      %v2134 = vpop.f32.mrf.mxu0
      %v2135 = vadd.f32 %v1974, %v2134
      %v2136 = vpop.f32.mrf.mxu0
      %v2137 = vpop.f32.mrf.mxu0
      %v2138 = vadd.f32 %v1977, %v2137
      %v2139 = vpop.f32.mrf.mxu0
      %2140 = vmatprep.mubr.bf16.mxu0 %v1085
      %2141 = vmatmul.mubr.bf16.gmra.mxu0 %v1021
      %v2142 = vpop.f32.mrf.mxu0
      %v2143 = vadd.f32 %v1982, %v2142
      %v2144 = vpop.f32.mrf.mxu0
      %v2145 = vpop.f32.mrf.mxu0
      %v2146 = vadd.f32 %v1985, %v2145
      %v2147 = vpop.f32.mrf.mxu0
      %2148 = vmatprep.mubr.bf16.mxu0 %v1086
      %2149 = vmatmul.mubr.bf16.gmra.mxu0 %v1022
      %v2150 = vpop.f32.mrf.mxu0
      %v2151 = vadd.f32 %v1990, %v2150
      %v2152 = vpop.f32.mrf.mxu0
      %v2153 = vpop.f32.mrf.mxu0
      %v2154 = vadd.f32 %v1993, %v2153
      %v2155 = vpop.f32.mrf.mxu0
      %2156 = vmatprep.mubr.bf16.mxu0 %v1087
      %2157 = vmatmul.mubr.bf16.gmra.mxu0 %v1023
      %v2158 = vpop.f32.mrf.mxu0
      %v2159 = vadd.f32 %v1998, %v2158
      %v2160 = vpop.f32.mrf.mxu0
      %v2161 = vpop.f32.mrf.mxu0
      %v2162 = vadd.f32 %v2001, %v2161
      %v2163 = vpop.f32.mrf.mxu0
      %2164 = vmatprep.mubr.bf16.mxu0 %v1088
      %2165 = vmatmul.mubr.bf16.gmra.mxu0 %v1024
      %v2166 = vpop.f32.mrf.mxu0
      %v2167 = vadd.f32 %v2006, %v2166
      %v2168 = vpop.f32.mrf.mxu0
      %v2169 = vpop.f32.mrf.mxu0
      %v2170 = vadd.f32 %v2009, %v2169
      %v2171 = vpop.f32.mrf.mxu0
      %2172 = vmatprep.mubr.bf16.mxu0 %v1089
      %2173 = vmatmul.mubr.bf16.gmra.mxu0 %v1025
      %v2174 = vpop.f32.mrf.mxu0
      %v2175 = vadd.f32 %v2014, %v2174
      %v2176 = vpop.f32.mrf.mxu0
      %v2177 = vpop.f32.mrf.mxu0
      %v2178 = vadd.f32 %v2017, %v2177
      %v2179 = vpop.f32.mrf.mxu0
      %2180 = vmatprep.mubr.bf16.mxu0 %v1090
      %2181 = vmatmul.mubr.bf16.gmra.mxu0 %v1026
      %v2182 = vpop.f32.mrf.mxu0
      %v2183 = vadd.f32 %v2022, %v2182
      %v2184 = vpop.f32.mrf.mxu0
      %v2185 = vpop.f32.mrf.mxu0
      %v2186 = vadd.f32 %v2025, %v2185
      %v2187 = vpop.f32.mrf.mxu0
      %2188 = vmatprep.mubr.bf16.mxu0 %v1117
      %2189 = vmatmul.mubr.bf16.gmra.mxu0 %v1113
      %v2190 = vpop.f32.mrf.mxu0
      %v2191 = vadd.f32 %v2030, %v2190
      %v2192 = vpop.f32.mrf.mxu0
      %v2193 = vpop.f32.mrf.mxu0
      %v2194 = vadd.f32 %v2033, %v2193
      %v2195 = vpop.f32.mrf.mxu0
      %2196 = vdwg.mxu0
      %2197 = vmatprep.subr.bf16.mxu0 0
      %2198 = vmatpush1.bf16.msra.mxu0 %v1625
      %2199 = vmatprep.subr.bf16.mxu0 0
      %2200 = vmatpush1.bf16.msra.mxu0 %v1624
      %2201 = vmatprep.subr.bf16.mxu0 0
      %2202 = vmatpush1.bf16.msra.mxu0 %v1623
      %2203 = vmatprep.subr.bf16.mxu0 0
      %2204 = vmatpush1.bf16.msra.mxu0 %v1622
      %2205 = vmatprep.subr.bf16.mxu0 0
      %2206 = vmatpush1.bf16.msra.mxu0 %v1621
      %2207 = vmatprep.subr.bf16.mxu0 0
      %2208 = vmatpush1.bf16.msra.mxu0 %v1620
      %2209 = vmatprep.subr.bf16.mxu0 0
      %2210 = vmatpush1.bf16.msra.mxu0 %v1619
      %2211 = vmatprep.subr.bf16.mxu0 0
      %2212 = vmatpush1.bf16.msra.mxu0 %v1618
      %2213 = vmatprep.subr.bf16.mxu0 0
      %2214 = vmatpush2.bf16.msra.mxu0 %v1633
      %2215 = vmatprep.subr.bf16.mxu0 0
      %2216 = vmatpush2.bf16.msra.mxu0 %v1632
      %2217 = vmatprep.subr.bf16.mxu0 0
      %2218 = vmatpush2.bf16.msra.mxu0 %v1631
      %2219 = vmatprep.subr.bf16.mxu0 0
      %2220 = vmatpush2.bf16.msra.mxu0 %v1630
      %2221 = vmatprep.subr.bf16.mxu0 0
      %2222 = vmatpush2.bf16.msra.mxu0 %v1629
      %2223 = vmatprep.subr.bf16.mxu0 0
      %2224 = vmatpush2.bf16.msra.mxu0 %v1628
      %2225 = vmatprep.subr.bf16.mxu0 0
      %2226 = vmatpush2.bf16.msra.mxu0 %v1627
      %2227 = vmatprep.subr.bf16.mxu0 0
      %2228 = vmatpush2.bf16.msra.mxu0 %v1626
      %2229 = vmatprep.mubr.bf16.mxu0 %v1013
      %2230 = vmatmul.mubr.bf16.gmra.mxu0 %v949
      %v2231 = vpop.f32.mrf.mxu0
      %v2232 = vadd.f32 %v2071, %v2231
      %v2233 = vpop.f32.mrf.mxu0
      %v2234 = vpop.f32.mrf.mxu0
      %v2235 = vadd.f32 %v2074, %v2234
      %v2236 = vpop.f32.mrf.mxu0
      %2237 = vmatprep.mubr.bf16.mxu0 %v1014
      %2238 = vmatmul.mubr.bf16.gmra.mxu0 %v950
      %v2239 = vpop.f32.mrf.mxu0
      %v2240 = vadd.f32 %v2079, %v2239
      %v2241 = vpop.f32.mrf.mxu0
      %v2242 = vpop.f32.mrf.mxu0
      %v2243 = vadd.f32 %v2082, %v2242
      %v2244 = vpop.f32.mrf.mxu0
      %2245 = vmatprep.mubr.bf16.mxu0 %v1015
      %2246 = vmatmul.mubr.bf16.gmra.mxu0 %v951
      %v2247 = vpop.f32.mrf.mxu0
      %v2248 = vadd.f32 %v2087, %v2247
      %v2249 = vpop.f32.mrf.mxu0
      %v2250 = vpop.f32.mrf.mxu0
      %v2251 = vadd.f32 %v2090, %v2250
      %v2252 = vpop.f32.mrf.mxu0
      %2253 = vmatprep.mubr.bf16.mxu0 %v1016
      %2254 = vmatmul.mubr.bf16.gmra.mxu0 %v952
      %v2255 = vpop.f32.mrf.mxu0
      %v2256 = vadd.f32 %v2095, %v2255
      %v2257 = vpop.f32.mrf.mxu0
      %v2258 = vpop.f32.mrf.mxu0
      %v2259 = vadd.f32 %v2098, %v2258
      %v2260 = vpop.f32.mrf.mxu0
      %2261 = vmatprep.mubr.bf16.mxu0 %v1017
      %2262 = vmatmul.mubr.bf16.gmra.mxu0 %v953
      %v2263 = vpop.f32.mrf.mxu0
      %v2264 = vadd.f32 %v2103, %v2263
      %v2265 = vpop.f32.mrf.mxu0
      %v2266 = vpop.f32.mrf.mxu0
      %v2267 = vadd.f32 %v2106, %v2266
      %v2268 = vpop.f32.mrf.mxu0
      %2269 = vmatprep.mubr.bf16.mxu0 %v1018
      %2270 = vmatmul.mubr.bf16.gmra.mxu0 %v954
      %v2271 = vpop.f32.mrf.mxu0
      %v2272 = vadd.f32 %v2111, %v2271
      %v2273 = vpop.f32.mrf.mxu0
      %v2274 = vpop.f32.mrf.mxu0
      %v2275 = vadd.f32 %v2114, %v2274
      %v2276 = vpop.f32.mrf.mxu0
      %2277 = vmatprep.mubr.bf16.mxu0 %v1019
      %2278 = vmatmul.mubr.bf16.gmra.mxu0 %v955
      %v2279 = vpop.f32.mrf.mxu0
      %v2280 = vadd.f32 %v2119, %v2279
      %v2281 = vpop.f32.mrf.mxu0
      %v2282 = vpop.f32.mrf.mxu0
      %v2283 = vadd.f32 %v2122, %v2282
      %v2284 = vpop.f32.mrf.mxu0
      %2285 = vmatprep.mubr.bf16.mxu0 %v1020
      %2286 = vmatmul.mubr.bf16.gmra.mxu0 %v956
      %v2287 = vpop.f32.mrf.mxu0
      %v2288 = vadd.f32 %v2127, %v2287
      %v2289 = vpop.f32.mrf.mxu0
      %v2290 = vpop.f32.mrf.mxu0
      %v2291 = vadd.f32 %v2130, %v2290
      %v2292 = vpop.f32.mrf.mxu0
      %2293 = vmatprep.mubr.bf16.mxu0 %v1021
      %2294 = vmatmul.mubr.bf16.gmra.mxu0 %v957
      %v2295 = vpop.f32.mrf.mxu0
      %v2296 = vadd.f32 %v2135, %v2295
      %v2297 = vpop.f32.mrf.mxu0
      %v2298 = vpop.f32.mrf.mxu0
      %v2299 = vadd.f32 %v2138, %v2298
      %v2300 = vpop.f32.mrf.mxu0
      %2301 = vmatprep.mubr.bf16.mxu0 %v1022
      %2302 = vmatmul.mubr.bf16.gmra.mxu0 %v958
      %v2303 = vpop.f32.mrf.mxu0
      %v2304 = vadd.f32 %v2143, %v2303
      %v2305 = vpop.f32.mrf.mxu0
      %v2306 = vpop.f32.mrf.mxu0
      %v2307 = vadd.f32 %v2146, %v2306
      %v2308 = vpop.f32.mrf.mxu0
      %2309 = vmatprep.mubr.bf16.mxu0 %v1023
      %2310 = vmatmul.mubr.bf16.gmra.mxu0 %v959
      %v2311 = vpop.f32.mrf.mxu0
      %v2312 = vadd.f32 %v2151, %v2311
      %v2313 = vpop.f32.mrf.mxu0
      %v2314 = vpop.f32.mrf.mxu0
      %v2315 = vadd.f32 %v2154, %v2314
      %v2316 = vpop.f32.mrf.mxu0
      %2317 = vmatprep.mubr.bf16.mxu0 %v1024
      %2318 = vmatmul.mubr.bf16.gmra.mxu0 %v960
      %v2319 = vpop.f32.mrf.mxu0
      %v2320 = vadd.f32 %v2159, %v2319
      %v2321 = vpop.f32.mrf.mxu0
      %v2322 = vpop.f32.mrf.mxu0
      %v2323 = vadd.f32 %v2162, %v2322
      %v2324 = vpop.f32.mrf.mxu0
      %2325 = vmatprep.mubr.bf16.mxu0 %v1025
      %2326 = vmatmul.mubr.bf16.gmra.mxu0 %v961
      %v2327 = vpop.f32.mrf.mxu0
      %v2328 = vadd.f32 %v2167, %v2327
      %v2329 = vpop.f32.mrf.mxu0
      %v2330 = vpop.f32.mrf.mxu0
      %v2331 = vadd.f32 %v2170, %v2330
      %v2332 = vpop.f32.mrf.mxu0
      %2333 = vmatprep.mubr.bf16.mxu0 %v1026
      %2334 = vmatmul.mubr.bf16.gmra.mxu0 %v962
      %v2335 = vpop.f32.mrf.mxu0
      %v2336 = vadd.f32 %v2175, %v2335
      %v2337 = vpop.f32.mrf.mxu0
      %v2338 = vpop.f32.mrf.mxu0
      %v2339 = vadd.f32 %v2178, %v2338
      %v2340 = vpop.f32.mrf.mxu0
      %2341 = vmatprep.mubr.bf16.mxu0 %v1113
      %2342 = vmatmul.mubr.bf16.gmra.mxu0 %v1109
      %v2343 = vpop.f32.mrf.mxu0
      %v2344 = vadd.f32 %v2183, %v2343
      %v2345 = vpop.f32.mrf.mxu0
      %v2346 = vpop.f32.mrf.mxu0
      %v2347 = vadd.f32 %v2186, %v2346
      %v2348 = vpop.f32.mrf.mxu0
      %2349 = vmatprep.mubr.bf16.mxu0 %v1125
      %2350 = vmatmul.mubr.bf16.gmra.mxu0 %v1121
      %v2351 = vpop.f32.mrf.mxu0
      %v2352 = vadd.f32 %v2191, %v2351
      %v2353 = vpop.f32.mrf.mxu0
      %v2354 = vpop.f32.mrf.mxu0
      %v2355 = vadd.f32 %v2194, %v2354
      %v2356 = vpop.f32.mrf.mxu0
      %2357 = vdwg.mxu0
      %2358 = vmatprep.subr.bf16.mxu0 0
      %2359 = vmatpush1.bf16.msra.mxu0 %v1641
      %2360 = vmatprep.subr.bf16.mxu0 0
      %2361 = vmatpush1.bf16.msra.mxu0 %v1640
      %2362 = vmatprep.subr.bf16.mxu0 0
      %2363 = vmatpush1.bf16.msra.mxu0 %v1639
      %2364 = vmatprep.subr.bf16.mxu0 0
      %2365 = vmatpush1.bf16.msra.mxu0 %v1638
      %2366 = vmatprep.subr.bf16.mxu0 0
      %2367 = vmatpush1.bf16.msra.mxu0 %v1637
      %2368 = vmatprep.subr.bf16.mxu0 0
      %2369 = vmatpush1.bf16.msra.mxu0 %v1636
      %2370 = vmatprep.subr.bf16.mxu0 0
      %2371 = vmatpush1.bf16.msra.mxu0 %v1635
      %2372 = vmatprep.subr.bf16.mxu0 0
      %2373 = vmatpush1.bf16.msra.mxu0 %v1634
      %2374 = vmatprep.subr.bf16.mxu0 0
      %2375 = vmatpush2.bf16.msra.mxu0 0
      %2376 = vmatprep.subr.bf16.mxu0 0
      %2377 = vmatpush2.bf16.msra.mxu0 0
      %2378 = vmatprep.subr.bf16.mxu0 0
      %2379 = vmatpush2.bf16.msra.mxu0 0
      %2380 = vmatprep.subr.bf16.mxu0 0
      %2381 = vmatpush2.bf16.msra.mxu0 0
      %2382 = vmatprep.subr.bf16.mxu0 0
      %2383 = vmatpush2.bf16.msra.mxu0 0
      %2384 = vmatprep.subr.bf16.mxu0 0
      %2385 = vmatpush2.bf16.msra.mxu0 0
      %2386 = vmatprep.subr.bf16.mxu0 0
      %2387 = vmatpush2.bf16.msra.mxu0 0
      %2388 = vmatprep.subr.bf16.mxu0 0
      %2389 = vmatpush2.bf16.msra.mxu0 0
      %2390 = vmatprep.mubr.bf16.mxu0 0
      %2391 = vmatmul.mubr.bf16.gmra.mxu0 %v1077
      %v2392 = vpop.f32.mrf.mxu0
      %v2393 = vadd.f32 %v2232, %v2392
      %v2394 = vpop.f32.mrf.mxu0
      %v2395 = vpop.f32.mrf.mxu0
      %v2396 = vadd.f32 %v2235, %v2395
      %v2397 = vpop.f32.mrf.mxu0
      %2398 = vmatprep.mubr.bf16.mxu0 0
      %2399 = vmatmul.mubr.bf16.gmra.mxu0 %v1078
      %v2400 = vpop.f32.mrf.mxu0
      %v2401 = vadd.f32 %v2240, %v2400
      %v2402 = vpop.f32.mrf.mxu0
      %v2403 = vpop.f32.mrf.mxu0
      %v2404 = vadd.f32 %v2243, %v2403
      %v2405 = vpop.f32.mrf.mxu0
      %2406 = vmatprep.mubr.bf16.mxu0 0
      %2407 = vmatmul.mubr.bf16.gmra.mxu0 %v1079
      %v2408 = vpop.f32.mrf.mxu0
      %v2409 = vadd.f32 %v2248, %v2408
      %v2410 = vpop.f32.mrf.mxu0
      %v2411 = vpop.f32.mrf.mxu0
      %v2412 = vadd.f32 %v2251, %v2411
      %v2413 = vpop.f32.mrf.mxu0
      %2414 = vmatprep.mubr.bf16.mxu0 0
      %2415 = vmatmul.mubr.bf16.gmra.mxu0 %v1080
      %v2416 = vpop.f32.mrf.mxu0
      %v2417 = vadd.f32 %v2256, %v2416
      %v2418 = vpop.f32.mrf.mxu0
      %v2419 = vpop.f32.mrf.mxu0
      %v2420 = vadd.f32 %v2259, %v2419
      %v2421 = vpop.f32.mrf.mxu0
      %2422 = vmatprep.mubr.bf16.mxu0 0
      %2423 = vmatmul.mubr.bf16.gmra.mxu0 %v1081
      %v2424 = vpop.f32.mrf.mxu0
      %v2425 = vadd.f32 %v2264, %v2424
      %v2426 = vpop.f32.mrf.mxu0
      %v2427 = vpop.f32.mrf.mxu0
      %v2428 = vadd.f32 %v2267, %v2427
      %v2429 = vpop.f32.mrf.mxu0
      %2430 = vmatprep.mubr.bf16.mxu0 0
      %2431 = vmatmul.mubr.bf16.gmra.mxu0 %v1082
      %v2432 = vpop.f32.mrf.mxu0
      %v2433 = vadd.f32 %v2272, %v2432
      %v2434 = vpop.f32.mrf.mxu0
      %v2435 = vpop.f32.mrf.mxu0
      %v2436 = vadd.f32 %v2275, %v2435
      %v2437 = vpop.f32.mrf.mxu0
      %2438 = vmatprep.mubr.bf16.mxu0 0
      %2439 = vmatmul.mubr.bf16.gmra.mxu0 %v1083
      %v2440 = vpop.f32.mrf.mxu0
      %v2441 = vadd.f32 %v2280, %v2440
      %v2442 = vpop.f32.mrf.mxu0
      %v2443 = vpop.f32.mrf.mxu0
      %v2444 = vadd.f32 %v2283, %v2443
      %v2445 = vpop.f32.mrf.mxu0
      %2446 = vmatprep.mubr.bf16.mxu0 0
      %2447 = vmatmul.mubr.bf16.gmra.mxu0 %v1084
      %v2448 = vpop.f32.mrf.mxu0
      %v2449 = vadd.f32 %v2288, %v2448
      %v2450 = vpop.f32.mrf.mxu0
      %v2451 = vpop.f32.mrf.mxu0
      %v2452 = vadd.f32 %v2291, %v2451
      %v2453 = vpop.f32.mrf.mxu0
      %2454 = vmatprep.mubr.bf16.mxu0 0
      %2455 = vmatmul.mubr.bf16.gmra.mxu0 %v1085
      %v2456 = vpop.f32.mrf.mxu0
      %v2457 = vadd.f32 %v2296, %v2456
      %v2458 = vpop.f32.mrf.mxu0
      %v2459 = vpop.f32.mrf.mxu0
      %v2460 = vadd.f32 %v2299, %v2459
      %v2461 = vpop.f32.mrf.mxu0
      %2462 = vmatprep.mubr.bf16.mxu0 0
      %2463 = vmatmul.mubr.bf16.gmra.mxu0 %v1086
      %v2464 = vpop.f32.mrf.mxu0
      %v2465 = vadd.f32 %v2304, %v2464
      %v2466 = vpop.f32.mrf.mxu0
      %v2467 = vpop.f32.mrf.mxu0
      %v2468 = vadd.f32 %v2307, %v2467
      %v2469 = vpop.f32.mrf.mxu0
      %2470 = vmatprep.mubr.bf16.mxu0 0
      %2471 = vmatmul.mubr.bf16.gmra.mxu0 %v1087
      %v2472 = vpop.f32.mrf.mxu0
      %v2473 = vadd.f32 %v2312, %v2472
      %v2474 = vpop.f32.mrf.mxu0
      %v2475 = vpop.f32.mrf.mxu0
      %v2476 = vadd.f32 %v2315, %v2475
      %v2477 = vpop.f32.mrf.mxu0
      %2478 = vmatprep.mubr.bf16.mxu0 0
      %2479 = vmatmul.mubr.bf16.gmra.mxu0 %v1088
      %v2480 = vpop.f32.mrf.mxu0
      %v2481 = vadd.f32 %v2320, %v2480
      %v2482 = vpop.f32.mrf.mxu0
      %v2483 = vpop.f32.mrf.mxu0
      %v2484 = vadd.f32 %v2323, %v2483
      %v2485 = vpop.f32.mrf.mxu0
      %2486 = vmatprep.mubr.bf16.mxu0 0
      %2487 = vmatmul.mubr.bf16.gmra.mxu0 %v1089
      %v2488 = vpop.f32.mrf.mxu0
      %v2489 = vadd.f32 %v2328, %v2488
      %v2490 = vpop.f32.mrf.mxu0
      %v2491 = vpop.f32.mrf.mxu0
      %v2492 = vadd.f32 %v2331, %v2491
      %v2493 = vpop.f32.mrf.mxu0
      %2494 = vmatprep.mubr.bf16.mxu0 0
      %2495 = vmatmul.mubr.bf16.gmra.mxu0 %v1090
      %v2496 = vpop.f32.mrf.mxu0
      %v2497 = vadd.f32 %v2336, %v2496
      %v2498 = vpop.f32.mrf.mxu0
      %v2499 = vpop.f32.mrf.mxu0
      %v2500 = vadd.f32 %v2339, %v2499
      %v2501 = vpop.f32.mrf.mxu0
      %2502 = vmatprep.mubr.bf16.mxu0 0
      %2503 = vmatmul.mubr.bf16.gmra.mxu0 %v1117
      %v2504 = vpop.f32.mrf.mxu0
      %v2505 = vadd.f32 %v2344, %v2504
      %v2506 = vpop.f32.mrf.mxu0
      %v2507 = vpop.f32.mrf.mxu0
      %v2508 = vadd.f32 %v2347, %v2507
      %v2509 = vpop.f32.mrf.mxu0
      %2510 = vmatprep.mubr.bf16.mxu0 0
      %2511 = vmatmul.mubr.bf16.gmra.mxu0 %v1129
      %v2512 = vpop.f32.mrf.mxu0
      %v2513 = vadd.f32 %v2352, %v2512
      %v2514 = vpop.f32.mrf.mxu0
      %v2515 = vpop.f32.mrf.mxu0
      %v2516 = vadd.f32 %v2355, %v2515
      %v2517 = vpop.f32.mrf.mxu0
      %2518 = vdwg.mxu0
      %v2519 = vpack.c.bf16 %v2396, %v2393
      %v2520 = vpack.c.bf16 %v2404, %v2401
      %v2521 = vpack.c.bf16 %v2412, %v2409
      %v2522 = vpack.c.bf16 %v2420, %v2417
      %v2523 = vpack.c.bf16 %v2428, %v2425
      %v2524 = vpack.c.bf16 %v2436, %v2433
      %v2525 = vpack.c.bf16 %v2444, %v2441
      %v2526 = vpack.c.bf16 %v2452, %v2449
      %v2527 = vpack.c.bf16 %v2460, %v2457
      %v2528 = vpack.c.bf16 %v2468, %v2465
      %v2529 = vpack.c.bf16 %v2476, %v2473
      %v2530 = vpack.c.bf16 %v2484, %v2481
      %v2531 = vpack.c.bf16 %v2492, %v2489
      %v2532 = vpack.c.bf16 %v2500, %v2497
      %v2533 = vpack.c.bf16 %v2508, %v2505
      %v2534 = vpack.c.bf16 %v2516, %v2513
      %v2551 = vunpack.c.l.b16 %v2519
      %v2552 = vunpack.c.h.b16 %v2519
      %v2553 = vunpack.c.l.b16 %v2520
      %v2554 = vunpack.c.h.b16 %v2520
      %v2555 = vunpack.c.l.b16 %v2521
      %v2556 = vunpack.c.h.b16 %v2521
      %v2557 = vunpack.c.l.b16 %v2522
      %v2558 = vunpack.c.h.b16 %v2522
      %v2559 = vunpack.c.l.b16 %v2523
      %v2560 = vunpack.c.h.b16 %v2523
      %v2561 = vunpack.c.l.b16 %v2524
      %v2562 = vunpack.c.h.b16 %v2524
      %v2563 = vunpack.c.l.b16 %v2525
      %v2564 = vunpack.c.h.b16 %v2525
      %v2565 = vunpack.c.l.b16 %v2526
      %v2566 = vunpack.c.h.b16 %v2526
      %v2567 = vunpack.c.l.b16 %v2527
      %v2568 = vunpack.c.h.b16 %v2527
      %v2569 = vunpack.c.l.b16 %v2528
      %v2570 = vunpack.c.h.b16 %v2528
      %v2571 = vunpack.c.l.b16 %v2529
      %v2572 = vunpack.c.h.b16 %v2529
      %v2573 = vunpack.c.l.b16 %v2530
      %v2574 = vunpack.c.h.b16 %v2530
      %v2575 = vunpack.c.l.b16 %v2531
      %v2576 = vunpack.c.h.b16 %v2531
      %v2577 = vunpack.c.l.b16 %v2532
      %v2578 = vunpack.c.h.b16 %v2532
      %v2579 = vunpack.c.l.b16 %v2533
      %v2580 = vunpack.c.h.b16 %v2533
      %v2581 = vunpack.c.l.b16 %v2534
      %v2582 = vunpack.c.h.b16 %v2534
      %v2583 = vpack.c.b16 %v2551, %v2551
      %v2584 = vpack.c.b16 %v2552, %v2552
      %v2585 = vpack.c.b16 %v2553, %v2553
      %v2586 = vpack.c.b16 %v2554, %v2554
      %v2587 = vpack.c.b16 %v2555, %v2555
      %v2588 = vpack.c.b16 %v2556, %v2556
      %v2589 = vpack.c.b16 %v2557, %v2557
      %v2590 = vpack.c.b16 %v2558, %v2558
      %v2591 = vpack.c.b16 %v2559, %v2559
      %v2592 = vpack.c.b16 %v2560, %v2560
      %v2593 = vpack.c.b16 %v2561, %v2561
      %v2594 = vpack.c.b16 %v2562, %v2562
      %v2595 = vpack.c.b16 %v2563, %v2563
      %v2596 = vpack.c.b16 %v2564, %v2564
      %v2597 = vpack.c.b16 %v2565, %v2565
      %v2598 = vpack.c.b16 %v2566, %v2566
      %v2599 = vpack.c.b16 %v2567, %v2567
      %v2600 = vpack.c.b16 %v2568, %v2568
      %v2601 = vpack.c.b16 %v2569, %v2569
      %v2602 = vpack.c.b16 %v2570, %v2570
      %v2603 = vpack.c.b16 %v2571, %v2571
      %v2604 = vpack.c.b16 %v2572, %v2572
      %v2605 = vpack.c.b16 %v2573, %v2573
      %v2606 = vpack.c.b16 %v2574, %v2574
      %v2607 = vpack.c.b16 %v2575, %v2575
      %v2608 = vpack.c.b16 %v2576, %v2576
      %v2609 = vpack.c.b16 %v2577, %v2577
      %v2610 = vpack.c.b16 %v2578, %v2578
      %v2611 = vpack.c.b16 %v2579, %v2579
      %v2612 = vpack.c.b16 %v2580, %v2580
      %v2613 = vpack.c.b16 %v2581, %v2581
      %v2614 = vpack.c.b16 %v2582, %v2582
      %2647 = vst [vmem:[%s235] sm:$0xf] %v2583
      %2648 = vst [vmem:[%s235 + $0x4] sm:$0xf] %v2584
      %2649 = vst [vmem:[%s235 + $0x8] sm:$0xf] %v2585
      %2650 = vst [vmem:[%s235 + $0xc] sm:$0xf] %v2586
      %2651 = vst [vmem:[%s235 + $0x10] sm:$0xf] %v2587
      %2652 = vst [vmem:[%s235 + $0x14] sm:$0xf] %v2588
      %2653 = vst [vmem:[%s235 + $0x18] sm:$0xf] %v2589
      %2654 = vst [vmem:[%s235 + $0x1c] sm:$0xf] %v2590
      %2655 = vst [vmem:[%s235 + $0x20] sm:$0xf] %v2591
      %2656 = vst [vmem:[%s235 + $0x24] sm:$0xf] %v2592
      %2657 = vst [vmem:[%s235 + $0x28] sm:$0xf] %v2593
      %2658 = vst [vmem:[%s235 + $0x2c] sm:$0xf] %v2594
      %2659 = vst [vmem:[%s235 + $0x30] sm:$0xf] %v2595
      %2660 = vst [vmem:[%s235 + $0x34] sm:$0xf] %v2596
      %2661 = vst [vmem:[%s235 + $0x38] sm:$0xf] %v2597
      %2662 = vst [vmem:[%s235 + $0x3c] sm:$0xf] %v2598
      %2663 = vst [vmem:[%s235 + $0x40] sm:$0xf] %v2599
      %2664 = vst [vmem:[%s235 + $0x44] sm:$0xf] %v2600
      %2665 = vst [vmem:[%s235 + $0x48] sm:$0xf] %v2601
      %2666 = vst [vmem:[%s235 + $0x4c] sm:$0xf] %v2602
      %2667 = vst [vmem:[%s235 + $0x50] sm:$0xf] %v2603
      %2668 = vst [vmem:[%s235 + $0x54] sm:$0xf] %v2604
      %2669 = vst [vmem:[%s235 + $0x58] sm:$0xf] %v2605
      %2670 = vst [vmem:[%s235 + $0x5c] sm:$0xf] %v2606
      %2671 = vst [vmem:[%s235 + $0x60] sm:$0xf] %v2607
      %2672 = vst [vmem:[%s235 + $0x64] sm:$0xf] %v2608
      %2673 = vst [vmem:[%s235 + $0x68] sm:$0xf] %v2609
      %2674 = vst [vmem:[%s235 + $0x6c] sm:$0xf] %v2610
      %2675 = vst [vmem:[%s235 + $0x70] sm:$0xf] %v2611
      %2676 = vst [vmem:[%s235 + $0x74] sm:$0xf] %v2612
      %2677 = vst [vmem:[%s235 + $0x78] sm:$0xf] %v2613
      %2678 = vst [vmem:[%s235 + $0x7c] sm:$0xf] %v2614
      %v2679 = vadd.f32 %v2393, %v2396
      %v2680 = vadd.f32 %v2679, %v2401
      %v2681 = vadd.f32 %v2680, %v2404
      %v2682 = vadd.f32 %v2681, %v2409
      %v2683 = vadd.f32 %v2682, %v2412
      %v2684 = vadd.f32 %v2683, %v2417
      %v2685 = vadd.f32 %v2684, %v2420
      %v2686 = vadd.f32 %v2685, %v2425
      %v2687 = vadd.f32 %v2686, %v2428
      %v2688 = vadd.f32 %v2687, %v2433
      %v2689 = vadd.f32 %v2688, %v2436
      %v2690 = vadd.f32 %v2689, %v2441
      %v2691 = vadd.f32 %v2690, %v2444
      %v2692 = vadd.f32 %v2691, %v2449
      %v2693 = vadd.f32 %v2692, %v2452
      %v2694 = vadd.f32 %v2693, %v2457
      %v2695 = vadd.f32 %v2694, %v2460
      %v2696 = vadd.f32 %v2695, %v2465
      %v2697 = vadd.f32 %v2696, %v2468
      %v2698 = vadd.f32 %v2697, %v2473
      %v2699 = vadd.f32 %v2698, %v2476
      %v2700 = vadd.f32 %v2699, %v2481
      %v2701 = vadd.f32 %v2700, %v2484
      %v2702 = vadd.f32 %v2701, %v2489
      %v2703 = vadd.f32 %v2702, %v2492
      %v2704 = vadd.f32 %v2703, %v2497
      %v2705 = vadd.f32 %v2704, %v2500
      %v2706 = vadd.f32 %v2705, %v2505
      %v2707 = vadd.f32 %v2706, %v2508
      %v2708 = vadd.f32 %v2707, %v2513
      %v2709 = vadd.f32 %v2708, %v2516
      %v2710 = vrot.slane %v2709, 4
      %v2711 = vadd.f32 %v2709, %v2710
      %v2712 = vrot.slane %v2711, 2
      %v2713 = vadd.f32 %v2711, %v2712
      %v2714 = vrot.slane %v2713, 1
      %v2715 = vadd.f32 %v2713, %v2714
      %2716 = vst [vmem:[%s238] sm:$0x1] %v2715
      %v2717 = vmul.f32 %v2393, %v2393
      %v2718 = vmul.f32 %v2396, %v2396
      %v2719 = vmul.f32 %v2401, %v2401
      %v2720 = vmul.f32 %v2404, %v2404
      %v2721 = vmul.f32 %v2409, %v2409
      %v2722 = vmul.f32 %v2412, %v2412
      %v2723 = vmul.f32 %v2417, %v2417
      %v2724 = vmul.f32 %v2420, %v2420
      %v2725 = vmul.f32 %v2425, %v2425
      %v2726 = vmul.f32 %v2428, %v2428
      %v2727 = vmul.f32 %v2433, %v2433
      %v2728 = vmul.f32 %v2436, %v2436
      %v2729 = vmul.f32 %v2441, %v2441
      %v2730 = vmul.f32 %v2444, %v2444
      %v2731 = vmul.f32 %v2449, %v2449
      %v2732 = vmul.f32 %v2452, %v2452
      %v2733 = vmul.f32 %v2457, %v2457
      %v2734 = vmul.f32 %v2460, %v2460
      %v2735 = vmul.f32 %v2465, %v2465
      %v2736 = vmul.f32 %v2468, %v2468
      %v2737 = vmul.f32 %v2473, %v2473
      %v2738 = vmul.f32 %v2476, %v2476
      %v2739 = vmul.f32 %v2481, %v2481
      %v2740 = vmul.f32 %v2484, %v2484
      %v2741 = vmul.f32 %v2489, %v2489
      %v2742 = vmul.f32 %v2492, %v2492
      %v2743 = vmul.f32 %v2497, %v2497
      %v2744 = vmul.f32 %v2500, %v2500
      %v2745 = vmul.f32 %v2505, %v2505
      %v2746 = vmul.f32 %v2508, %v2508
      %v2747 = vmul.f32 %v2513, %v2513
      %v2748 = vmul.f32 %v2516, %v2516
      %v2749 = vadd.f32 %v2717, %v2718
      %v2750 = vadd.f32 %v2749, %v2719
      %v2751 = vadd.f32 %v2750, %v2720
      %v2752 = vadd.f32 %v2751, %v2721
      %v2753 = vadd.f32 %v2752, %v2722
      %v2754 = vadd.f32 %v2753, %v2723
      %v2755 = vadd.f32 %v2754, %v2724
      %v2756 = vadd.f32 %v2755, %v2725
      %v2757 = vadd.f32 %v2756, %v2726
      %v2758 = vadd.f32 %v2757, %v2727
      %v2759 = vadd.f32 %v2758, %v2728
      %v2760 = vadd.f32 %v2759, %v2729
      %v2761 = vadd.f32 %v2760, %v2730
      %v2762 = vadd.f32 %v2761, %v2731
      %v2763 = vadd.f32 %v2762, %v2732
      %v2764 = vadd.f32 %v2763, %v2733
      %v2765 = vadd.f32 %v2764, %v2734
      %v2766 = vadd.f32 %v2765, %v2735
      %v2767 = vadd.f32 %v2766, %v2736
      %v2768 = vadd.f32 %v2767, %v2737
      %v2769 = vadd.f32 %v2768, %v2738
      %v2770 = vadd.f32 %v2769, %v2739
      %v2771 = vadd.f32 %v2770, %v2740
      %v2772 = vadd.f32 %v2771, %v2741
      %v2773 = vadd.f32 %v2772, %v2742
      %v2774 = vadd.f32 %v2773, %v2743
      %v2775 = vadd.f32 %v2774, %v2744
      %v2776 = vadd.f32 %v2775, %v2745
      %v2777 = vadd.f32 %v2776, %v2746
      %v2778 = vadd.f32 %v2777, %v2747
      %v2779 = vadd.f32 %v2778, %v2748
      %v2780 = vrot.slane %v2779, 4
      %v2781 = vadd.f32 %v2779, %v2780
      %v2782 = vrot.slane %v2781, 2
      %v2783 = vadd.f32 %v2781, %v2782
      %v2784 = vrot.slane %v2783, 1
      %v2785 = vadd.f32 %v2783, %v2784
      %2786 = vst [vmem:[%s241] sm:$0x1] %v2785
      %p2787 = scmp.lt.s32.totalorder %s17, 1
      %s2788 = scalar_select %p2787, %s17, 1
      %s2789 = smul.addr %s2788, 32
      %s2790 = smul.addr %s2789, 4
      %s2791 = scalar_lea.vmem %s3, %s2790
      %p2792 = scmp.lt.s32.totalorder %s17, 1
      %s2793 = scalar_select %p2792, %s17, 1
      %s2794 = scalar_lea.vmem %s4, %s2793
      %p2795 = scmp.lt.s32.totalorder %s17, 1
      %s2796 = scalar_select %p2795, %s17, 1
      %s2797 = scalar_lea.vmem %s5, %s2796
      // Predicated region
      $region33: #{conv_block.2} parent=31 // pred_check
        %p2798 = pneg %p103
      $region34: #{conv_block.2} parent=31 // pred_check_branch
        %2800 = sbr.rel (%p2798) target = $region36
      $region35: #{conv_block.2} parent=31 // pred_region
        _
      $region36: #{conv_block.2} parent=31 // pred_fallthru
        _
      // Predicated region
      $region37: #{conv_block.2} parent=31 // pred_check
        %p2801 = pneg %p129
      $region38: #{conv_block.2} parent=31 // pred_check_branch
        %2803 = sbr.rel (%p2801) target = $region40
      $region39: #{conv_block.2} parent=31 // pred_region
        _
      $region40: #{conv_block.2} parent=31 // pred_fallthru
        _
      // Predicated region
      $region41: #{conv_block.2} parent=31 // pred_check
        %p2804 = pneg %p155
      $region42: #{conv_block.2} parent=31 // pred_check_branch
        %2806 = sbr.rel (%p2804) target = $region44
      $region43: #{conv_block.2} parent=31 // pred_region
        _
      $region44: #{conv_block.2} parent=31 // pred_fallthru
        _
    $region32: #{conv_block.2} parent=5 // pred_fallthru
      _
    %p2807 = scmp.le.s32.totalorder 2, %s12
    // Predicated region
    $region45: #{conv_block.2} parent=5 // pred_check
      %p2808 = pneg %p2807
    $region46: #{conv_block.2} parent=5 // pred_check_branch
      %2810 = sbr.rel (%p2808) target = $region48
    $region47: #{conv_block.2} parent=5 // pred_region
      %s2811 = ssub.s32 %s12, 2
      // Predicated region
      $region49: #{conv_block.2} parent=47 // pred_check
        %p2812 = pneg %p109
      $region50: #{conv_block.2} parent=47 // pred_check_branch
        %2814 = sbr.rel (%p2812) target = $region52
      $region51: #{conv_block.2} parent=47 // pred_region
        %p2815 = scmp.lt.s32.totalorder %s18, 1
        %s2816 = scalar_select %p2815, %s18, 1
        %s2817 = smul.addr %s2816, 32
        %s2818 = smul.addr %s2817, 4
        %s2819 = scalar_lea.vmem %s3, %s2818
      $region52: #{conv_block.2} parent=47 // pred_fallthru
        _
      // Predicated region
      $region53: #{conv_block.2} parent=47 // pred_check
        %p2820 = pneg %p135
      $region54: #{conv_block.2} parent=47 // pred_check_branch
        %2822 = sbr.rel (%p2820) target = $region56
      $region55: #{conv_block.2} parent=47 // pred_region
        %p2823 = scmp.lt.s32.totalorder %s18, 1
        %s2824 = scalar_select %p2823, %s18, 1
        %s2825 = scalar_lea.vmem %s4, %s2824
      $region56: #{conv_block.2} parent=47 // pred_fallthru
        _
      // Predicated region
      $region57: #{conv_block.2} parent=47 // pred_check
        %p2826 = pneg %p161
      $region58: #{conv_block.2} parent=47 // pred_check_branch
        %2828 = sbr.rel (%p2826) target = $region60
      $region59: #{conv_block.2} parent=47 // pred_region
        %p2829 = scmp.lt.s32.totalorder %s18, 1
        %s2830 = scalar_select %p2829, %s18, 1
        %s2831 = scalar_lea.vmem %s5, %s2830
      $region60: #{conv_block.2} parent=47 // pred_fallthru
        _
    $region48: #{conv_block.2} parent=5 // pred_fallthru
      _
  $region6: #{conv_block.2} parent=0 // loop_footer
    %s16 = sadd.s32 1, %s12
  $region7: #{conv_block.2} parent=0 // loop_footer_branch
    %11 = sbr.rel target = $region3
  $region8: #{conv_block.2} parent=0 // loop_exit
    _

</llo_original>
